<compile_context>
chip_gen: v6e
topology: v6e:2x2x1
jax: 0.10.0
libtpu: 0.0.40
codegen_flags: <defaults>
</compile_context>

<pallas_src>
import math
from functools import partial

import jax
import jax.numpy as jnp
from jax.experimental import pallas as pl
from jax.experimental.pallas import tpu as pltpu  # noqa: F401  (TPU backend assumed)

# ----- small roberta-like config -----
VOCAB = 64
MAX_POS = 40
HIDDEN = 32
N_LAYERS = 2
N_HEADS = 2
HEAD_DIM = HIDDEN // N_HEADS
FFN = 64
CLS_NUM = 4
LN_EPS = 1e-5
PAD_IDX = 1


def _full_spec(shape):
    # whole-array block (grid=()); block == full array dims satisfies tiling constraints
    return pl.BlockSpec(shape, lambda: (0,) * len(shape))


def _ln(x, g, b, eps=LN_EPS):
    mu = jnp.mean(x, axis=-1, keepdims=True)
    var = jnp.mean((x - mu) ** 2, axis=-1, keepdims=True)
    return (x - mu) * jax.lax.rsqrt(var + eps) * g + b


# ---------------- Pallas kernels ----------------

def _emb_ln_kernel(x_ref, g_ref, b_ref, o_ref, *, eps):
    x = x_ref[...].astype(jnp.float32)
    o_ref[...] = _ln(x, g_ref[...], b_ref[...], eps).astype(o_ref.dtype)


def layer_norm(x, gamma, beta, eps=LN_EPS):
    M, H = x.shape
    return pl.pallas_call(
        partial(_emb_ln_kernel, eps=eps),
        out_shape=jax.ShapeDtypeStruct((M, H), jnp.float32),
        in_specs=[_full_spec((M, H)), _full_spec((1, H)), _full_spec((1, H))],
        out_specs=_full_spec((M, H)),
    )(x, gamma.reshape(1, H), beta.reshape(1, H))


def _encoder_layer_kernel(x_ref, bias_ref, wqkv_ref, bqkv_ref, wo_ref, bo_ref,
                          ln1g_ref, ln1b_ref, w1_ref, b1_ref, w2_ref, b2_ref,
                          ln2g_ref, ln2b_ref, o_ref, *, B, S, H, NH, HD):
    BS = B * S
    x = x_ref[...]                                             # [BS, H] f32
    xb = x.astype(jnp.bfloat16)

    # fused QKV projection (scale for Q already folded into the weights/bias)
    qkv = jnp.dot(xb, wqkv_ref[...],
                  preferred_element_type=jnp.float32) + bqkv_ref[...]   # [BS, 3H] f32

    bias = bias_ref[...]                                       # [B, S] additive mask
    acc = jnp.zeros((BS, H), jnp.float32)
    for hi in range(NH):                                       # small, fully unrolled
        q = qkv[:, hi * HD:(hi + 1) * HD].reshape(B, S, HD)
        k = qkv[:, H + hi * HD:H + (hi + 1) * HD].reshape(B, S, HD)
        v = qkv[:, 2 * H + hi * HD:2 * H + (hi + 1) * HD].reshape(B, S, HD)

        s = jnp.einsum("bqd,bkd->bqk", q.astype(jnp.bfloat16), k.astype(jnp.bfloat16),
                       preferred_element_type=jnp.float32)
        s = s + bias[:, None, :]
        m = jnp.max(s, axis=-1, keepdims=True)
        e = jnp.exp(s - m)
        p = e * pl.reciprocal(jnp.sum(e, axis=-1, keepdims=True), approx=True)
        c = jnp.einsum("bqk,bkd->bqd", p.astype(jnp.bfloat16), v.astype(jnp.bfloat16),
                       preferred_element_type=jnp.float32)     # [B, S, HD]

        # per-head output projection (wo regrouped as [NH, HD, H]) accumulated in f32
        acc = acc + jnp.dot(c.reshape(BS, HD).astype(jnp.bfloat16), wo_ref[hi],
                            preferred_element_type=jnp.float32)

    attn_out = acc + bo_ref[...]
    h1 = _ln(attn_out + x, ln1g_ref[...], ln1b_ref[...])

    ff = jnp.dot(h1.astype(jnp.bfloat16), w1_ref[...],
                 preferred_element_type=jnp.float32) + b1_ref[...]
    ff = jax.nn.gelu(ff, approximate=True)
    ff = jnp.dot(ff.astype(jnp.bfloat16), w2_ref[...],
                 preferred_element_type=jnp.float32) + b2_ref[...]
    h2 = _ln(ff + h1, ln2g_ref[...], ln2b_ref[...])
    o_ref[...] = h2.astype(o_ref.dtype)


def encoder_layer(h_flat, bias, lyr, B, S):
    BS = B * S
    H = HIDDEN
    return pl.pallas_call(
        partial(_encoder_layer_kernel, B=B, S=S, H=H, NH=N_HEADS, HD=HEAD_DIM),
        out_shape=jax.ShapeDtypeStruct((BS, H), jnp.float32),
        in_specs=[_full_spec((BS, H)), _full_spec((B, S)),
                  _full_spec((H, 3 * H)), _full_spec((1, 3 * H)),
                  _full_spec((N_HEADS, HEAD_DIM, H)), _full_spec((1, H)),
                  _full_spec((1, H)), _full_spec((1, H)),
                  _full_spec((H, FFN)), _full_spec((1, FFN)),
                  _full_spec((FFN, H)), _full_spec((1, H)),
                  _full_spec((1, H)), _full_spec((1, H))],
        out_specs=_full_spec((BS, H)),
    )(h_flat, bias, lyr["wqkv"], lyr["bqkv"], lyr["wo"], lyr["bo"],
      lyr["ln1_g"], lyr["ln1_b"], lyr["w1"], lyr["b1"],
      lyr["w2"], lyr["b2"], lyr["ln2_g"], lyr["ln2_b"])


def _gru_kernel(seq_ref, wih0_ref, whh0_ref, bih0_ref, bhh0_ref,
                wih1_ref, whh1_ref, bih1_ref, bhh1_ref, o_ref, *, T, H):
    def cell(x, h, wih, whh, bih, bhh):
        gi = jnp.dot(x.astype(jnp.bfloat16), wih,
                     preferred_element_type=jnp.float32) + bih    # [1, 3H]
        gh = jnp.dot(h.astype(jnp.bfloat16), whh,
                     preferred_element_type=jnp.float32) + bhh
        r = jax.nn.sigmoid(gi[:, :H] + gh[:, :H])
        z = jax.nn.sigmoid(gi[:, H:2 * H] + gh[:, H:2 * H])
        n = jnp.tanh(gi[:, 2 * H:] + r * gh[:, 2 * H:])
        return (1.0 - z) * n + z * h

    layers = ((wih0_ref[...], whh0_ref[...], bih0_ref[...], bhh0_ref[...]),
              (wih1_ref[...], whh1_ref[...], bih1_ref[...], bhh1_ref[...]))
    xs = [seq_ref[pl.ds(t, 1), :] for t in range(T)]              # each [1, H]
    # TODO(synk): nn.GRU inter-layer dropout(0.3) is train-only; eval no-op here.
    for (wih, whh, bih, bhh) in layers:
        h = jnp.zeros((1, H), jnp.float32)                        # h0 = zeros
        ys = []
        for t in range(T):
            h = cell(xs[t], h, wih, whh, bih, bhh)
            ys.append(h)
        xs = ys
    o_ref[...] = xs[-1].astype(o_ref.dtype)                       # last step, last layer


@jax.jit
def gru_forward(gru_params, seq):  # seq: [T, H]
    T = seq.shape[0]
    H = HIDDEN
    l0, l1 = gru_params
    return pl.pallas_call(
        partial(_gru_kernel, T=T, H=H),
        out_shape=jax.ShapeDtypeStruct((1, H), jnp.float32),
        in_specs=[_full_spec((T, H)),
                  _full_spec((H, 3 * H)), _full_spec((H, 3 * H)),
                  _full_spec((1, 3 * H)), _full_spec((1, 3 * H)),
                  _full_spec((H, 3 * H)), _full_spec((H, 3 * H)),
                  _full_spec((1, 3 * H)), _full_spec((1, 3 * H))],
        out_specs=_full_spec((1, H)),
    )(seq, l0["wih"], l0["whh"], l0["bih"], l0["bhh"],
      l1["wih"], l1["whh"], l1["bih"], l1["bhh"])


def _classifier_kernel(a_ref, p_ref, w_ref, b_ref, o_ref):
    x = (a_ref[...] + p_ref[...]).astype(jnp.bfloat16)
    o_ref[...] = (jnp.dot(x, w_ref[...], preferred_element_type=jnp.float32)
                  + b_ref[...]).astype(o_ref.dtype)


@jax.jit
def classifier(com_cls, pm_final, w, b):
    B, H = com_cls.shape
    N = w.shape[1]
    return pl.pallas_call(
        _classifier_kernel,
        out_shape=jax.ShapeDtypeStruct((B, N), jnp.float32),
        in_specs=[_full_spec((B, H)), _full_spec((B, H)),
                  _full_spec((H, N)), _full_spec((1, N))],
        out_specs=_full_spec((B, N)),
    )(com_cls, pm_final, w, b)


# ---------------- parameter init (deterministic, synthetic) ----------------

def init_linear(key, fan_in, fan_out):
    kw, kb = jax.random.split(key)
    w = jax.random.normal(kw, (fan_in, fan_out), jnp.float32) * 0.02
    b = jax.random.normal(kb, (fan_out,), jnp.float32) * 0.02
    return w, b


def init_roberta(key):
    keys = jax.random.split(key, 4 + N_LAYERS)
    params = {
        "word_emb": jax.random.normal(keys[0], (VOCAB, HIDDEN), jnp.float32) * 0.02,
        "pos_emb": jax.random.normal(keys[1], (MAX_POS, HIDDEN), jnp.float32) * 0.02,
        "type_emb": jax.random.normal(keys[2], (1, HIDDEN), jnp.float32) * 0.02,
        "emb_ln_g": jnp.ones((HIDDEN,), jnp.float32),
        "emb_ln_b": jnp.zeros((HIDDEN,), jnp.float32),
        "layers": [],
    }
    scale = 1.0 / math.sqrt(HEAD_DIM)
    for li in range(N_LAYERS):
        lk = jax.random.split(keys[4 + li], 6)
        wq, bq = init_linear(lk[0], HIDDEN, HIDDEN)
        wk, bk = init_linear(lk[1], HIDDEN, HIDDEN)
        wv, bv = init_linear(lk[2], HIDDEN, HIDDEN)
        wo, bo = init_linear(lk[3], HIDDEN, HIDDEN)
        w1, b1 = init_linear(lk[4], HIDDEN, FFN)
        w2, b2 = init_linear(lk[5], FFN, HIDDEN)
        params["layers"].append({
            # fused QKV; 1/sqrt(head_dim) folded into the Q projection (weight + bias)
            "wqkv": jnp.concatenate([wq * scale, wk, wv], axis=1).astype(jnp.bfloat16),
            "bqkv": jnp.concatenate([bq * scale, bk, bv]).reshape(1, 3 * HIDDEN),
            # output projection rows regrouped per head -> kernel indexes heads directly
            "wo": wo.reshape(N_HEADS, HEAD_DIM, HIDDEN).astype(jnp.bfloat16),
            "bo": bo.reshape(1, HIDDEN),
            "ln1_g": jnp.ones((1, HIDDEN), jnp.float32),
            "ln1_b": jnp.zeros((1, HIDDEN), jnp.float32),
            "w1": w1.astype(jnp.bfloat16), "b1": b1.reshape(1, FFN),
            "w2": w2.astype(jnp.bfloat16), "b2": b2.reshape(1, HIDDEN),
            "ln2_g": jnp.ones((1, HIDDEN), jnp.float32),
            "ln2_b": jnp.zeros((1, HIDDEN), jnp.float32),
        })
    return params


def init_gru(key, num_layers=2):
    layers = []
    std = 1.0 / math.sqrt(HIDDEN)
    for lk in jax.random.split(key, num_layers):
        k = jax.random.split(lk, 4)
        wih = jax.random.uniform(k[0], (3, HIDDEN, HIDDEN), jnp.float32, -std, std)
        whh = jax.random.uniform(k[1], (3, HIDDEN, HIDDEN), jnp.float32, -std, std)
        bih = jax.random.uniform(k[2], (3, HIDDEN), jnp.float32, -std, std)
        bhh = jax.random.uniform(k[3], (3, HIDDEN), jnp.float32, -std, std)
        layers.append({
            # gate order r | z | n concatenated along the output columns
            "wih": jnp.concatenate([wih[0], wih[1], wih[2]], axis=1).astype(jnp.bfloat16),
            "whh": jnp.concatenate([whh[0], whh[1], whh[2]], axis=1).astype(jnp.bfloat16),
            "bih": bih.reshape(1, 3 * HIDDEN),
            "bhh": bhh.reshape(1, 3 * HIDDEN),
        })
    return layers


# ---------------- model forward (glue in JAX, compute in Pallas) ----------------

@jax.jit
def roberta_forward(rp, input_ids, attention_mask):
    B, S = input_ids.shape
    mask_f = attention_mask.astype(jnp.float32)
    # roberta-style position ids: cumsum of mask offset by padding_idx
    pos_ids = (jnp.cumsum(attention_mask, axis=1) * attention_mask + PAD_IDX).astype(jnp.int32)

    h = (rp["word_emb"][input_ids]
         + rp["pos_emb"][pos_ids]
         + rp["type_emb"][0][None, None, :]).reshape(B * S, HIDDEN)
    h = layer_norm(h, rp["emb_ln_g"], rp["emb_ln_b"])

    bias = (1.0 - mask_f) * -1e9                    # [B, S] additive attention mask
    for lyr in rp["layers"]:
        h = encoder_layer(h, bias, lyr, B, S)       # one fused pallas_call per layer
    return h.reshape(B, S, HIDDEN)                  # last_hidden_state


def erc_forward(params, batch_tokens, batch_mask, batch_pm_input):
    # CoM RoBERTa -> CLS token
    com_cls = roberta_forward(params["com"], batch_tokens, batch_mask)[:, 0, :]   # [B, H]

    # PM RoBERTa: batch ALL utterances of ALL conversations into ONE forward pass
    counts = [len(pm_inputs) for pm_inputs in batch_pm_input]
    flat = [pm_ids for pm_inputs in batch_pm_input for pm_ids in pm_inputs]
    if flat:
        pm_ids = jnp.concatenate(flat, axis=0)                                     # [T_total, S]
        pm_cls = roberta_forward(params["pm"], pm_ids,
                                 jnp.ones_like(pm_ids))[:, 0, :]                   # [T_total, H]
    pm_finals, off = [], 0
    for c in counts:
        if c > 0:
            pm_finals.append(gru_forward(params["gru"], pm_cls[off:off + c]))      # [1, H]
            off += c
        else:
            pm_finals.append(jnp.zeros((1, HIDDEN), jnp.float32))
    pm_final = jnp.concatenate(pm_finals, axis=0)                                  # [B, H]

    # classifier (add fused inside the kernel)
    return classifier(com_cls, pm_final, params["W_w"], params["W_b"])


if __name__ == "__main__":
    key = jax.random.PRNGKey(0)
    k_com, k_pm, k_gru, k_w, k_data = jax.random.split(key, 5)
    params = {
        "com": init_roberta(k_com),
        "pm": init_roberta(k_pm),
        "gru": init_gru(k_gru),
    }
    W_w, W_b = init_linear(k_w, HIDDEN, CLS_NUM)
    params["W_w"] = W_w.astype(jnp.bfloat16)
    params["W_b"] = W_b.reshape(1, CLS_NUM)

    B, S = 2, 8
    kd = jax.random.split(k_data, 4)
    batch_padding_token = jax.random.randint(kd[0], (B, S), 2, VOCAB, dtype=jnp.int32)
    batch_padding_attention_mask = jnp.array(
        [[1, 1, 1, 1, 1, 1, 0, 0],
         [1, 1, 1, 1, 1, 1, 1, 1]], jnp.int32)
    pm0_a = jax.random.randint(kd[1], (1, S), 2, VOCAB, dtype=jnp.int32)
    pm0_b = jax.random.randint(kd[2], (1, S), 2, VOCAB, dtype=jnp.int32)
    # sample 0 has a 2-utterance PM history; sample 1 has none (zeros branch)
    batch_PM_input = [[pm0_a, pm0_b], []]

    out = erc_forward(params, batch_padding_token, batch_padding_attention_mask,
                      batch_PM_input)
    jax.block_until_ready(out)
    assert out.shape == (B, CLS_NUM) and out.dtype == jnp.float32
    print("KERNEL_OK")
</pallas_src>

<mosaic_0001>
module attributes {stable_mosaic.version = 11 : i64} {
  func.func @_emb_ln_kernel(%arg0: memref<16x32xf32, #tpu.memory_space<vmem>>, %arg1: memref<1x32xf32, #tpu.memory_space<vmem>>, %arg2: memref<1x32xf32, #tpu.memory_space<vmem>>, %arg3: memref<16x32xf32, #tpu.memory_space<vmem>>) attributes {dimension_semantics = [], scalar_prefetch = 0 : i64, scratch_operands = 0 : i64, tpu.core_type = #tpu.core_type<tc>} {
    %c0 = arith.constant 0 : index
    %c0_0 = arith.constant 0 : index
    %0 = vector.load %arg0[%c0, %c0_0] : memref<16x32xf32, #tpu.memory_space<vmem>>, vector<16x32xf32>
    %c0_1 = arith.constant 0 : index
    %c0_2 = arith.constant 0 : index
    %1 = vector.load %arg1[%c0_1, %c0_2] : memref<1x32xf32, #tpu.memory_space<vmem>>, vector<1x32xf32>
    %c0_3 = arith.constant 0 : index
    %c0_4 = arith.constant 0 : index
    %2 = vector.load %arg2[%c0_3, %c0_4] : memref<1x32xf32, #tpu.memory_space<vmem>>, vector<1x32xf32>
    %cst = arith.constant dense<0.000000e+00> : vector<16xf32>
    %3 = vector.multi_reduction <add>, %0, %cst [1] : vector<16x32xf32> to vector<16xf32>
    %4 = vector.shape_cast %3 : vector<16xf32> to vector<16x1xf32>
    %cst_5 = arith.constant 3.200000e+01 : f32
    %5 = vector.broadcast %cst_5 : f32 to vector<16x1xf32>
    %6 = arith.divf %4, %5 : vector<16x1xf32>
    %7 = vector.broadcast %6 : vector<16x1xf32> to vector<16x32xf32>
    %8 = arith.subf %0, %7 : vector<16x32xf32>
    %9 = arith.mulf %8, %8 : vector<16x32xf32>
    %cst_6 = arith.constant dense<0.000000e+00> : vector<16xf32>
    %10 = vector.multi_reduction <add>, %9, %cst_6 [1] : vector<16x32xf32> to vector<16xf32>
    %11 = vector.shape_cast %10 : vector<16xf32> to vector<16x1xf32>
    %cst_7 = arith.constant 3.200000e+01 : f32
    %12 = vector.broadcast %cst_7 : f32 to vector<16x1xf32>
    %13 = arith.divf %11, %12 : vector<16x1xf32>
    %14 = vector.broadcast %6 : vector<16x1xf32> to vector<16x32xf32>
    %15 = arith.subf %0, %14 : vector<16x32xf32>
    %cst_8 = arith.constant 9.99999974E-6 : f32
    %16 = vector.broadcast %cst_8 : f32 to vector<16x1xf32>
    %17 = arith.addf %13, %16 : vector<16x1xf32>
    %18 = math.rsqrt %17 : vector<16x1xf32>
    %19 = vector.broadcast %18 : vector<16x1xf32> to vector<16x32xf32>
    %20 = arith.mulf %15, %19 : vector<16x32xf32>
    %21 = vector.broadcast %1 : vector<1x32xf32> to vector<16x32xf32>
    %22 = arith.mulf %20, %21 : vector<16x32xf32>
    %23 = vector.broadcast %2 : vector<1x32xf32> to vector<16x32xf32>
    %24 = arith.addf %22, %23 : vector<16x32xf32>
    %c0_9 = arith.constant 0 : index
    %c0_10 = arith.constant 0 : index
    %25 = vector.load %arg3[%c0_9, %c0_10] : memref<16x32xf32, #tpu.memory_space<vmem>>, vector<16x32xf32>
    tpu.vector_store %arg3[%c0_9, %c0_10], %24 {strides = array<i32>} : memref<16x32xf32, #tpu.memory_space<vmem>>, vector<16x32xf32>,
    return
  }
}

module attributes {stable_mosaic.version = 11 : i64} {
  func.func @_encoder_layer_kernel(%arg0: memref<16x32xf32, #tpu.memory_space<vmem>>, %arg1: memref<2x8xf32, #tpu.memory_space<vmem>>, %arg2: memref<32x96xbf16, #tpu.memory_space<vmem>>, %arg3: memref<1x96xf32, #tpu.memory_space<vmem>>, %arg4: memref<2x16x32xbf16, #tpu.memory_space<vmem>>, %arg5: memref<1x32xf32, #tpu.memory_space<vmem>>, %arg6: memref<1x32xf32, #tpu.memory_space<vmem>>, %arg7: memref<1x32xf32, #tpu.memory_space<vmem>>, %arg8: memref<32x64xbf16, #tpu.memory_space<vmem>>, %arg9: memref<1x64xf32, #tpu.memory_space<vmem>>, %arg10: memref<64x32xbf16, #tpu.memory_space<vmem>>, %arg11: memref<1x32xf32, #tpu.memory_space<vmem>>, %arg12: memref<1x32xf32, #tpu.memory_space<vmem>>, %arg13: memref<1x32xf32, #tpu.memory_space<vmem>>, %arg14: memref<16x32xf32, #tpu.memory_space<vmem>>) attributes {dimension_semantics = [], scalar_prefetch = 0 : i64, scratch_operands = 0 : i64, tpu.core_type = #tpu.core_type<tc>} {
    %c0 = arith.constant 0 : index
    %c0_0 = arith.constant 0 : index
    %0 = vector.load %arg0[%c0, %c0_0] : memref<16x32xf32, #tpu.memory_space<vmem>>, vector<16x32xf32>
    %1 = arith.truncf %0 : vector<16x32xf32> to vector<16x32xbf16>
    %c0_1 = arith.constant 0 : index
    %c0_2 = arith.constant 0 : index
    %2 = vector.load %arg2[%c0_1, %c0_2] : memref<32x96xbf16, #tpu.memory_space<vmem>>, vector<32x96xbf16>
    %cst = arith.constant dense<0.000000e+00> : vector<16x96xf32>
    %3 = tpu.matmul %1, %2, %cst {dimension_numbers = #tpu.dot_dimension_numbers<[1], [0], [0], [1], [0, 0, 1, 1], [], []>} : vector<16x32xbf16>, vector<32x96xbf16>, vector<16x96xf32> -> vector<16x96xf32>
    %c0_3 = arith.constant 0 : index
    %c0_4 = arith.constant 0 : index
    %4 = vector.load %arg3[%c0_3, %c0_4] : memref<1x96xf32, #tpu.memory_space<vmem>>, vector<1x96xf32>
    %5 = vector.broadcast %4 : vector<1x96xf32> to vector<16x96xf32>
    %6 = arith.addf %3, %5 : vector<16x96xf32>
    %c0_5 = arith.constant 0 : index
    %c0_6 = arith.constant 0 : index
    %7 = vector.load %arg1[%c0_5, %c0_6] : memref<2x8xf32, #tpu.memory_space<vmem>>, vector<2x8xf32>
    %cst_7 = arith.constant 0.000000e+00 : f32
    %8 = vector.broadcast %cst_7 : f32 to vector<16x32xf32>
    %9 = vector.extract_strided_slice %6 {offsets = [0, 0], sizes = [16, 16], strides = [1, 1]} : vector<16x96xf32> to vector<16x16xf32>
    %10 = vector.shape_cast %9 : vector<16x16xf32> to vector<2x8x16xf32>
    %11 = vector.extract_strided_slice %6 {offsets = [0, 32], sizes = [16, 16], strides = [1, 1]} : vector<16x96xf32> to vector<16x16xf32>
    %12 = vector.shape_cast %11 : vector<16x16xf32> to vector<2x8x16xf32>
    %13 = vector.extract_strided_slice %6 {offsets = [0, 64], sizes = [16, 16], strides = [1, 1]} : vector<16x96xf32> to vector<16x16xf32>
    %14 = vector.shape_cast %13 : vector<16x16xf32> to vector<2x8x16xf32>
    %15 = arith.truncf %10 : vector<2x8x16xf32> to vector<2x8x16xbf16>
    %16 = arith.truncf %12 : vector<2x8x16xf32> to vector<2x8x16xbf16>
    "tpu.trace_start"() <{level = 10 : i32, message = "bqd,bkd->bqk"}> : () -> ()
    %cst_8 = arith.constant dense<0.000000e+00> : vector<2x8x8xf32>
    %17 = tpu.matmul %15, %16, %cst_8 {dimension_numbers = #tpu.dot_dimension_numbers<[2], [2], [1], [1], [0, 0, 0, 1, 1, 1], [0], [0]>} : vector<2x8x16xbf16>, vector<2x8x16xbf16>, vector<2x8x8xf32> -> vector<2x8x8xf32>
    "tpu.trace_stop"() : () -> ()
    %18 = vector.shape_cast %7 : vector<2x8xf32> to vector<2x1x8xf32>
    %19 = vector.broadcast %18 : vector<2x1x8xf32> to vector<2x8x8xf32>
    %20 = arith.addf %17, %19 : vector<2x8x8xf32>
    %cst_9 = arith.constant dense<0xFF800000> : vector<2x8xf32>
    %21 = vector.multi_reduction <maximumf>, %20, %cst_9 [2] : vector<2x8x8xf32> to vector<2x8xf32>
    %22 = vector.shape_cast %21 : vector<2x8xf32> to vector<2x8x1xf32>
    %23 = vector.broadcast %22 : vector<2x8x1xf32> to vector<2x8x8xf32>
    %24 = arith.subf %20, %23 : vector<2x8x8xf32>
    %25 = math.exp %24 : vector<2x8x8xf32>
    %cst_10 = arith.constant dense<0.000000e+00> : vector<2x8xf32>
    %26 = vector.multi_reduction <add>, %25, %cst_10 [2] : vector<2x8x8xf32> to vector<2x8xf32>
    %27 = vector.shape_cast %26 : vector<2x8xf32> to vector<2x8x1xf32>
    %28 = tpu.reciprocal %27 {approx = true} : vector<2x8x1xf32> -> vector<2x8x1xf32>
    %29 = vector.broadcast %28 : vector<2x8x1xf32> to vector<2x8x8xf32>
    %30 = arith.mulf %25, %29 : vector<2x8x8xf32>
    %31 = arith.truncf %30 : vector<2x8x8xf32> to vector<2x8x8xbf16>
    %32 = arith.truncf %14 : vector<2x8x16xf32> to vector<2x8x16xbf16>
    "tpu.trace_start"() <{level = 10 : i32, message = "bqk,bkd->bqd"}> : () -> ()
    %cst_11 = arith.constant dense<0.000000e+00> : vector<2x8x16xf32>
    %33 = tpu.matmul %31, %32, %cst_11 {dimension_numbers = #tpu.dot_dimension_numbers<[2], [1], [1], [2], [0, 0, 0, 1, 1, 2], [0], [0]>} : vector<2x8x8xbf16>, vector<2x8x16xbf16>, vector<2x8x16xf32> -> vector<2x8x16xf32>
    "tpu.trace_stop"() : () -> ()
    %34 = vector.shape_cast %33 : vector<2x8x16xf32> to vector<16x16xf32>
    %35 = arith.truncf %34 : vector<16x16xf32> to vector<16x16xbf16>
    %c0_12 = arith.constant 0 : index
    %c0_13 = arith.constant 0 : index
    %c0_14 = arith.constant 0 : index
    %36 = vector.load %arg4[%c0_12, %c0_13, %c0_14] : memref<2x16x32xbf16, #tpu.memory_space<vmem>>, vector<1x16x32xbf16>
    %37 = vector.shape_cast %36 : vector<1x16x32xbf16> to vector<16x32xbf16>
    %cst_15 = arith.constant dense<0.000000e+00> : vector<16x32xf32>
    %38 = tpu.matmul %35, %37, %cst_15 {dimension_numbers = #tpu.dot_dimension_numbers<[1], [0], [0], [1], [0, 0, 1, 1], [], []>} : vector<16x16xbf16>, vector<16x32xbf16>, vector<16x32xf32> -> vector<16x32xf32>
    %39 = arith.addf %8, %38 : vector<16x32xf32>
    %40 = vector.extract_strided_slice %6 {offsets = [0, 16], sizes = [16, 16], strides = [1, 1]} : vector<16x96xf32> to vector<16x16xf32>
    %41 = vector.shape_cast %40 : vector<16x16xf32> to vector<2x8x16xf32>
    %42 = vector.extract_strided_slice %6 {offsets = [0, 48], sizes = [16, 16], strides = [1, 1]} : vector<16x96xf32> to vector<16x16xf32>
    %43 = vector.shape_cast %42 : vector<16x16xf32> to vector<2x8x16xf32>
    %44 = vector.extract_strided_slice %6 {offsets = [0, 80], sizes = [16, 16], strides = [1, 1]} : vector<16x96xf32> to vector<16x16xf32>
    %45 = vector.shape_cast %44 : vector<16x16xf32> to vector<2x8x16xf32>
    %46 = arith.truncf %41 : vector<2x8x16xf32> to vector<2x8x16xbf16>
    %47 = arith.truncf %43 : vector<2x8x16xf32> to vector<2x8x16xbf16>
    "tpu.trace_start"() <{level = 10 : i32, message = "bqd,bkd->bqk"}> : () -> ()
    %cst_16 = arith.constant dense<0.000000e+00> : vector<2x8x8xf32>
    %48 = tpu.matmul %46, %47, %cst_16 {dimension_numbers = #tpu.dot_dimension_numbers<[2], [2], [1], [1], [0, 0, 0, 1, 1, 1], [0], [0]>} : vector<2x8x16xbf16>, vector<2x8x16xbf16>, vector<2x8x8xf32> -> vector<2x8x8xf32>
    "tpu.trace_stop"() : () -> ()
    %49 = vector.shape_cast %7 : vector<2x8xf32> to vector<2x1x8xf32>
    %50 = vector.broadcast %49 : vector<2x1x8xf32> to vector<2x8x8xf32>
    %51 = arith.addf %48, %50 : vector<2x8x8xf32>
    %cst_17 = arith.constant dense<0xFF800000> : vector<2x8xf32>
    %52 = vector.multi_reduction <maximumf>, %51, %cst_17 [2] : vector<2x8x8xf32> to vector<2x8xf32>
    %53 = vector.shape_cast %52 : vector<2x8xf32> to vector<2x8x1xf32>
    %54 = vector.broadcast %53 : vector<2x8x1xf32> to vector<2x8x8xf32>
    %55 = arith.subf %51, %54 : vector<2x8x8xf32>
    %56 = math.exp %55 : vector<2x8x8xf32>
    %cst_18 = arith.constant dense<0.000000e+00> : vector<2x8xf32>
    %57 = vector.multi_reduction <add>, %56, %cst_18 [2] : vector<2x8x8xf32> to vector<2x8xf32>
    %58 = vector.shape_cast %57 : vector<2x8xf32> to vector<2x8x1xf32>
    %59 = tpu.reciprocal %58 {approx = true} : vector<2x8x1xf32> -> vector<2x8x1xf32>
    %60 = vector.broadcast %59 : vector<2x8x1xf32> to vector<2x8x8xf32>
    %61 = arith.mulf %56, %60 : vector<2x8x8xf32>
    %62 = arith.truncf %61 : vector<2x8x8xf32> to vector<2x8x8xbf16>
    %63 = arith.truncf %45 : vector<2x8x16xf32> to vector<2x8x16xbf16>
    "tpu.trace_start"() <{level = 10 : i32, message = "bqk,bkd->bqd"}> : () -> ()
    %cst_19 = arith.constant dense<0.000000e+00> : vector<2x8x16xf32>
    %64 = tpu.matmul %62, %63, %cst_19 {dimension_numbers = #tpu.dot_dimension_numbers<[2], [1], [1], [2], [0, 0, 0, 1, 1, 2], [0], [0]>} : vector<2x8x8xbf16>, vector<2x8x16xbf16>, vector<2x8x16xf32> -> vector<2x8x16xf32>
    "tpu.trace_stop"() : () -> ()
    %65 = vector.shape_cast %64 : vector<2x8x16xf32> to vector<16x16xf32>
    %66 = arith.truncf %65 : vector<16x16xf32> to vector<16x16xbf16>
    %c1 = arith.constant 1 : index
    %c0_20 = arith.constant 0 : index
    %c0_21 = arith.constant 0 : index
    %67 = vector.load %arg4[%c1, %c0_20, %c0_21] : memref<2x16x32xbf16, #tpu.memory_space<vmem>>, vector<1x16x32xbf16>
    %68 = vector.shape_cast %67 : vector<1x16x32xbf16> to vector<16x32xbf16>
    %cst_22 = arith.constant dense<0.000000e+00> : vector<16x32xf32>
    %69 = tpu.matmul %66, %68, %cst_22 {dimension_numbers = #tpu.dot_dimension_numbers<[1], [0], [0], [1], [0, 0, 1, 1], [], []>} : vector<16x16xbf16>, vector<16x32xbf16>, vector<16x32xf32> -> vector<16x32xf32>
    %70 = arith.addf %39, %69 : vector<16x32xf32>
    %c0_23 = arith.constant 0 : index
    %c0_24 = arith.constant 0 : index
    %71 = vector.load %arg5[%c0_23, %c0_24] : memref<1x32xf32, #tpu.memory_space<vmem>>, vector<1x32xf32>
    %72 = vector.broadcast %71 : vector<1x32xf32> to vector<16x32xf32>
    %73 = arith.addf %70, %72 : vector<16x32xf32>
    %74 = arith.addf %73, %0 : vector<16x32xf32>
    %c0_25 = arith.constant 0 : index
    %c0_26 = arith.constant 0 : index
    %75 = vector.load %arg6[%c0_25, %c0_26] : memref<1x32xf32, #tpu.memory_space<vmem>>, vector<1x32xf32>
    %c0_27 = arith.constant 0 : index
    %c0_28 = arith.constant 0 : index
    %76 = vector.load %arg7[%c0_27, %c0_28] : memref<1x32xf32, #tpu.memory_space<vmem>>, vector<1x32xf32>
    %cst_29 = arith.constant dense<0.000000e+00> : vector<16xf32>
    %77 = vector.multi_reduction <add>, %74, %cst_29 [1] : vector<16x32xf32> to vector<16xf32>
    %78 = vector.shape_cast %77 : vector<16xf32> to vector<16x1xf32>
    %cst_30 = arith.constant 3.200000e+01 : f32
    %79 = vector.broadcast %cst_30 : f32 to vector<16x1xf32>
    %80 = arith.divf %78, %79 : vector<16x1xf32>
    %81 = vector.broadcast %80 : vector<16x1xf32> to vector<16x32xf32>
    %82 = arith.subf %74, %81 : vector<16x32xf32>
    %83 = arith.mulf %82, %82 : vector<16x32xf32>
    %cst_31 = arith.constant dense<0.000000e+00> : vector<16xf32>
    %84 = vector.multi_reduction <add>, %83, %cst_31 [1] : vector<16x32xf32> to vector<16xf32>
    %85 = vector.shape_cast %84 : vector<16xf32> to vector<16x1xf32>
    %cst_32 = arith.constant 3.200000e+01 : f32
    %86 = vector.broadcast %cst_32 : f32 to vector<16x1xf32>
    %87 = arith.divf %85, %86 : vector<16x1xf32>
    %88 = vector.broadcast %80 : vector<16x1xf32> to vector<16x32xf32>
    %89 = arith.subf %74, %88 : vector<16x32xf32>
    %cst_33 = arith.constant 9.99999974E-6 : f32
    %90 = vector.broadcast %cst_33 : f32 to vector<16x1xf32>
    %91 = arith.addf %87, %90 : vector<16x1xf32>
    %92 = math.rsqrt %91 : vector<16x1xf32>
    %93 = vector.broadcast %92 : vector<16x1xf32> to vector<16x32xf32>
    %94 = arith.mulf %89, %93 : vector<16x32xf32>
    %95 = vector.broadcast %75 : vector<1x32xf32> to vector<16x32xf32>
    %96 = arith.mulf %94, %95 : vector<16x32xf32>
    %97 = vector.broadcast %76 : vector<1x32xf32> to vector<16x32xf32>
    %98 = arith.addf %96, %97 : vector<16x32xf32>
    %99 = arith.truncf %98 : vector<16x32xf32> to vector<16x32xbf16>
    %c0_34 = arith.constant 0 : index
    %c0_35 = arith.constant 0 : index
    %100 = vector.load %arg8[%c0_34, %c0_35] : memref<32x64xbf16, #tpu.memory_space<vmem>>, vector<32x64xbf16>
    %cst_36 = arith.constant dense<0.000000e+00> : vector<16x64xf32>
    %101 = tpu.matmul %99, %100, %cst_36 {dimension_numbers = #tpu.dot_dimension_numbers<[1], [0], [0], [1], [0, 0, 1, 1], [], []>} : vector<16x32xbf16>, vector<32x64xbf16>, vector<16x64xf32> -> vector<16x64xf32>
    %c0_37 = arith.constant 0 : index
    %c0_38 = arith.constant 0 : index
    %102 = vector.load %arg9[%c0_37, %c0_38] : memref<1x64xf32, #tpu.memory_space<vmem>>, vector<1x64xf32>
    %103 = vector.broadcast %102 : vector<1x64xf32> to vector<16x64xf32>
    %104 = arith.addf %101, %103 : vector<16x64xf32>
    %105 = arith.mulf %104, %104 : vector<16x64xf32>
    %106 = arith.mulf %104, %105 : vector<16x64xf32>
    %cst_39 = arith.constant 4.471500e-02 : f32
    %107 = vector.broadcast %cst_39 : f32 to vector<16x64xf32>
    %108 = arith.mulf %107, %106 : vector<16x64xf32>
    %109 = arith.addf %104, %108 : vector<16x64xf32>
    %cst_40 = arith.constant 0.797884583 : f32
    %110 = vector.broadcast %cst_40 : f32 to vector<16x64xf32>
    %111 = arith.mulf %110, %109 : vector<16x64xf32>
    %112 = math.tanh %111 : vector<16x64xf32>
    %cst_41 = arith.constant 1.000000e+00 : f32
    %113 = vector.broadcast %cst_41 : f32 to vector<16x64xf32>
    %114 = arith.addf %113, %112 : vector<16x64xf32>
    %cst_42 = arith.constant 5.000000e-01 : f32
    %115 = vector.broadcast %cst_42 : f32 to vector<16x64xf32>
    %116 = arith.mulf %115, %114 : vector<16x64xf32>
    %117 = arith.mulf %104, %116 : vector<16x64xf32>
    %118 = arith.truncf %117 : vector<16x64xf32> to vector<16x64xbf16>
    %c0_43 = arith.constant 0 : index
    %c0_44 = arith.constant 0 : index
    %119 = vector.load %arg10[%c0_43, %c0_44] : memref<64x32xbf16, #tpu.memory_space<vmem>>, vector<64x32xbf16>
    %cst_45 = arith.constant dense<0.000000e+00> : vector<16x32xf32>
    %120 = tpu.matmul %118, %119, %cst_45 {dimension_numbers = #tpu.dot_dimension_numbers<[1], [0], [0], [1], [0, 0, 1, 1], [], []>} : vector<16x64xbf16>, vector<64x32xbf16>, vector<16x32xf32> -> vector<16x32xf32>
    %c0_46 = arith.constant 0 : index
    %c0_47 = arith.constant 0 : index
    %121 = vector.load %arg11[%c0_46, %c0_47] : memref<1x32xf32, #tpu.memory_space<vmem>>, vector<1x32xf32>
    %122 = vector.broadcast %121 : vector<1x32xf32> to vector<16x32xf32>
    %123 = arith.addf %120, %122 : vector<16x32xf32>
    %124 = arith.addf %123, %98 : vector<16x32xf32>
    %c0_48 = arith.constant 0 : index
    %c0_49 = arith.constant 0 : index
    %125 = vector.load %arg12[%c0_48, %c0_49] : memref<1x32xf32, #tpu.memory_space<vmem>>, vector<1x32xf32>
    %c0_50 = arith.constant 0 : index
    %c0_51 = arith.constant 0 : index
    %126 = vector.load %arg13[%c0_50, %c0_51] : memref<1x32xf32, #tpu.memory_space<vmem>>, vector<1x32xf32>
    %cst_52 = arith.constant dense<0.000000e+00> : vector<16xf32>
    %127 = vector.multi_reduction <add>, %124, %cst_52 [1] : vector<16x32xf32> to vector<16xf32>
    %128 = vector.shape_cast %127 : vector<16xf32> to vector<16x1xf32>
    %cst_53 = arith.constant 3.200000e+01 : f32
    %129 = vector.broadcast %cst_53 : f32 to vector<16x1xf32>
    %130 = arith.divf %128, %129 : vector<16x1xf32>
    %131 = vector.broadcast %130 : vector<16x1xf32> to vector<16x32xf32>
    %132 = arith.subf %124, %131 : vector<16x32xf32>
    %133 = arith.mulf %132, %132 : vector<16x32xf32>
    %cst_54 = arith.constant dense<0.000000e+00> : vector<16xf32>
    %134 = vector.multi_reduction <add>, %133, %cst_54 [1] : vector<16x32xf32> to vector<16xf32>
    %135 = vector.shape_cast %134 : vector<16xf32> to vector<16x1xf32>
    %cst_55 = arith.constant 3.200000e+01 : f32
    %136 = vector.broadcast %cst_55 : f32 to vector<16x1xf32>
    %137 = arith.divf %135, %136 : vector<16x1xf32>
    %138 = vector.broadcast %130 : vector<16x1xf32> to vector<16x32xf32>
    %139 = arith.subf %124, %138 : vector<16x32xf32>
    %cst_56 = arith.constant 9.99999974E-6 : f32
    %140 = vector.broadcast %cst_56 : f32 to vector<16x1xf32>
    %141 = arith.addf %137, %140 : vector<16x1xf32>
    %142 = math.rsqrt %141 : vector<16x1xf32>
    %143 = vector.broadcast %142 : vector<16x1xf32> to vector<16x32xf32>
    %144 = arith.mulf %139, %143 : vector<16x32xf32>
    %145 = vector.broadcast %125 : vector<1x32xf32> to vector<16x32xf32>
    %146 = arith.mulf %144, %145 : vector<16x32xf32>
    %147 = vector.broadcast %126 : vector<1x32xf32> to vector<16x32xf32>
    %148 = arith.addf %146, %147 : vector<16x32xf32>
    %c0_57 = arith.constant 0 : index
    %c0_58 = arith.constant 0 : index
    %149 = vector.load %arg14[%c0_57, %c0_58] : memref<16x32xf32, #tpu.memory_space<vmem>>, vector<16x32xf32>
    tpu.vector_store %arg14[%c0_57, %c0_58], %148 {strides = array<i32>} : memref<16x32xf32, #tpu.memory_space<vmem>>, vector<16x32xf32>,
    return
  }
}

module attributes {stable_mosaic.version = 11 : i64} {
  func.func @_encoder_layer_kernel(%arg0: memref<16x32xf32, #tpu.memory_space<vmem>>, %arg1: memref<2x8xf32, #tpu.memory_space<vmem>>, %arg2: memref<32x96xbf16, #tpu.memory_space<vmem>>, %arg3: memref<1x96xf32, #tpu.memory_space<vmem>>, %arg4: memref<2x16x32xbf16, #tpu.memory_space<vmem>>, %arg5: memref<1x32xf32, #tpu.memory_space<vmem>>, %arg6: memref<1x32xf32, #tpu.memory_space<vmem>>, %arg7: memref<1x32xf32, #tpu.memory_space<vmem>>, %arg8: memref<32x64xbf16, #tpu.memory_space<vmem>>, %arg9: memref<1x64xf32, #tpu.memory_space<vmem>>, %arg10: memref<64x32xbf16, #tpu.memory_space<vmem>>, %arg11: memref<1x32xf32, #tpu.memory_space<vmem>>, %arg12: memref<1x32xf32, #tpu.memory_space<vmem>>, %arg13: memref<1x32xf32, #tpu.memory_space<vmem>>, %arg14: memref<16x32xf32, #tpu.memory_space<vmem>>) attributes {dimension_semantics = [], scalar_prefetch = 0 : i64, scratch_operands = 0 : i64, tpu.core_type = #tpu.core_type<tc>} {
    %c0 = arith.constant 0 : index
    %c0_0 = arith.constant 0 : index
    %0 = vector.load %arg0[%c0, %c0_0] : memref<16x32xf32, #tpu.memory_space<vmem>>, vector<16x32xf32>
    %1 = arith.truncf %0 : vector<16x32xf32> to vector<16x32xbf16>
    %c0_1 = arith.constant 0 : index
    %c0_2 = arith.constant 0 : index
    %2 = vector.load %arg2[%c0_1, %c0_2] : memref<32x96xbf16, #tpu.memory_space<vmem>>, vector<32x96xbf16>
    %cst = arith.constant dense<0.000000e+00> : vector<16x96xf32>
    %3 = tpu.matmul %1, %2, %cst {dimension_numbers = #tpu.dot_dimension_numbers<[1], [0], [0], [1], [0, 0, 1, 1], [], []>} : vector<16x32xbf16>, vector<32x96xbf16>, vector<16x96xf32> -> vector<16x96xf32>
    %c0_3 = arith.constant 0 : index
    %c0_4 = arith.constant 0 : index
    %4 = vector.load %arg3[%c0_3, %c0_4] : memref<1x96xf32, #tpu.memory_space<vmem>>, vector<1x96xf32>
    %5 = vector.broadcast %4 : vector<1x96xf32> to vector<16x96xf32>
    %6 = arith.addf %3, %5 : vector<16x96xf32>
    %c0_5 = arith.constant 0 : index
    %c0_6 = arith.constant 0 : index
    %7 = vector.load %arg1[%c0_5, %c0_6] : memref<2x8xf32, #tpu.memory_space<vmem>>, vector<2x8xf32>
    %cst_7 = arith.constant 0.000000e+00 : f32
    %8 = vector.broadcast %cst_7 : f32 to vector<16x32xf32>
    %9 = vector.extract_strided_slice %6 {offsets = [0, 0], sizes = [16, 16], strides = [1, 1]} : vector<16x96xf32> to vector<16x16xf32>
    %10 = vector.shape_cast %9 : vector<16x16xf32> to vector<2x8x16xf32>
    %11 = vector.extract_strided_slice %6 {offsets = [0, 32], sizes = [16, 16], strides = [1, 1]} : vector<16x96xf32> to vector<16x16xf32>
    %12 = vector.shape_cast %11 : vector<16x16xf32> to vector<2x8x16xf32>
    %13 = vector.extract_strided_slice %6 {offsets = [0, 64], sizes = [16, 16], strides = [1, 1]} : vector<16x96xf32> to vector<16x16xf32>
    %14 = vector.shape_cast %13 : vector<16x16xf32> to vector<2x8x16xf32>
    %15 = arith.truncf %10 : vector<2x8x16xf32> to vector<2x8x16xbf16>
    %16 = arith.truncf %12 : vector<2x8x16xf32> to vector<2x8x16xbf16>
    "tpu.trace_start"() <{level = 10 : i32, message = "bqd,bkd->bqk"}> : () -> ()
    %cst_8 = arith.constant dense<0.000000e+00> : vector<2x8x8xf32>
    %17 = tpu.matmul %15, %16, %cst_8 {dimension_numbers = #tpu.dot_dimension_numbers<[2], [2], [1], [1], [0, 0, 0, 1, 1, 1], [0], [0]>} : vector<2x8x16xbf16>, vector<2x8x16xbf16>, vector<2x8x8xf32> -> vector<2x8x8xf32>
    "tpu.trace_stop"() : () -> ()
    %18 = vector.shape_cast %7 : vector<2x8xf32> to vector<2x1x8xf32>
    %19 = vector.broadcast %18 : vector<2x1x8xf32> to vector<2x8x8xf32>
    %20 = arith.addf %17, %19 : vector<2x8x8xf32>
    %cst_9 = arith.constant dense<0xFF800000> : vector<2x8xf32>
    %21 = vector.multi_reduction <maximumf>, %20, %cst_9 [2] : vector<2x8x8xf32> to vector<2x8xf32>
    %22 = vector.shape_cast %21 : vector<2x8xf32> to vector<2x8x1xf32>
    %23 = vector.broadcast %22 : vector<2x8x1xf32> to vector<2x8x8xf32>
    %24 = arith.subf %20, %23 : vector<2x8x8xf32>
    %25 = math.exp %24 : vector<2x8x8xf32>
    %cst_10 = arith.constant dense<0.000000e+00> : vector<2x8xf32>
    %26 = vector.multi_reduction <add>, %25, %cst_10 [2] : vector<2x8x8xf32> to vector<2x8xf32>
    %27 = vector.shape_cast %26 : vector<2x8xf32> to vector<2x8x1xf32>
    %28 = tpu.reciprocal %27 {approx = true} : vector<2x8x1xf32> -> vector<2x8x1xf32>
    %29 = vector.broadcast %28 : vector<2x8x1xf32> to vector<2x8x8xf32>
    %30 = arith.mulf %25, %29 : vector<2x8x8xf32>
    %31 = arith.truncf %30 : vector<2x8x8xf32> to vector<2x8x8xbf16>
    %32 = arith.truncf %14 : vector<2x8x16xf32> to vector<2x8x16xbf16>
    "tpu.trace_start"() <{level = 10 : i32, message = "bqk,bkd->bqd"}> : () -> ()
    %cst_11 = arith.constant dense<0.000000e+00> : vector<2x8x16xf32>
    %33 = tpu.matmul %31, %32, %cst_11 {dimension_numbers = #tpu.dot_dimension_numbers<[2], [1], [1], [2], [0, 0, 0, 1, 1, 2], [0], [0]>} : vector<2x8x8xbf16>, vector<2x8x16xbf16>, vector<2x8x16xf32> -> vector<2x8x16xf32>
    "tpu.trace_stop"() : () -> ()
    %34 = vector.shape_cast %33 : vector<2x8x16xf32> to vector<16x16xf32>
    %35 = arith.truncf %34 : vector<16x16xf32> to vector<16x16xbf16>
    %c0_12 = arith.constant 0 : index
    %c0_13 = arith.constant 0 : index
    %c0_14 = arith.constant 0 : index
    %36 = vector.load %arg4[%c0_12, %c0_13, %c0_14] : memref<2x16x32xbf16, #tpu.memory_space<vmem>>, vector<1x16x32xbf16>
    %37 = vector.shape_cast %36 : vector<1x16x32xbf16> to vector<16x32xbf16>
    %cst_15 = arith.constant dense<0.000000e+00> : vector<16x32xf32>
    %38 = tpu.matmul %35, %37, %cst_15 {dimension_numbers = #tpu.dot_dimension_numbers<[1], [0], [0], [1], [0, 0, 1, 1], [], []>} : vector<16x16xbf16>, vector<16x32xbf16>, vector<16x32xf32> -> vector<16x32xf32>
    %39 = arith.addf %8, %38 : vector<16x32xf32>
    %40 = vector.extract_strided_slice %6 {offsets = [0, 16], sizes = [16, 16], strides = [1, 1]} : vector<16x96xf32> to vector<16x16xf32>
    %41 = vector.shape_cast %40 : vector<16x16xf32> to vector<2x8x16xf32>
    %42 = vector.extract_strided_slice %6 {offsets = [0, 48], sizes = [16, 16], strides = [1, 1]} : vector<16x96xf32> to vector<16x16xf32>
    %43 = vector.shape_cast %42 : vector<16x16xf32> to vector<2x8x16xf32>
    %44 = vector.extract_strided_slice %6 {offsets = [0, 80], sizes = [16, 16], strides = [1, 1]} : vector<16x96xf32> to vector<16x16xf32>
    %45 = vector.shape_cast %44 : vector<16x16xf32> to vector<2x8x16xf32>
    %46 = arith.truncf %41 : vector<2x8x16xf32> to vector<2x8x16xbf16>
    %47 = arith.truncf %43 : vector<2x8x16xf32> to vector<2x8x16xbf16>
    "tpu.trace_start"() <{level = 10 : i32, message = "bqd,bkd->bqk"}> : () -> ()
    %cst_16 = arith.constant dense<0.000000e+00> : vector<2x8x8xf32>
    %48 = tpu.matmul %46, %47, %cst_16 {dimension_numbers = #tpu.dot_dimension_numbers<[2], [2], [1], [1], [0, 0, 0, 1, 1, 1], [0], [0]>} : vector<2x8x16xbf16>, vector<2x8x16xbf16>, vector<2x8x8xf32> -> vector<2x8x8xf32>
    "tpu.trace_stop"() : () -> ()
    %49 = vector.shape_cast %7 : vector<2x8xf32> to vector<2x1x8xf32>
    %50 = vector.broadcast %49 : vector<2x1x8xf32> to vector<2x8x8xf32>
    %51 = arith.addf %48, %50 : vector<2x8x8xf32>
    %cst_17 = arith.constant dense<0xFF800000> : vector<2x8xf32>
    %52 = vector.multi_reduction <maximumf>, %51, %cst_17 [2] : vector<2x8x8xf32> to vector<2x8xf32>
    %53 = vector.shape_cast %52 : vector<2x8xf32> to vector<2x8x1xf32>
    %54 = vector.broadcast %53 : vector<2x8x1xf32> to vector<2x8x8xf32>
    %55 = arith.subf %51, %54 : vector<2x8x8xf32>
    %56 = math.exp %55 : vector<2x8x8xf32>
    %cst_18 = arith.constant dense<0.000000e+00> : vector<2x8xf32>
    %57 = vector.multi_reduction <add>, %56, %cst_18 [2] : vector<2x8x8xf32> to vector<2x8xf32>
    %58 = vector.shape_cast %57 : vector<2x8xf32> to vector<2x8x1xf32>
    %59 = tpu.reciprocal %58 {approx = true} : vector<2x8x1xf32> -> vector<2x8x1xf32>
    %60 = vector.broadcast %59 : vector<2x8x1xf32> to vector<2x8x8xf32>
    %61 = arith.mulf %56, %60 : vector<2x8x8xf32>
    %62 = arith.truncf %61 : vector<2x8x8xf32> to vector<2x8x8xbf16>
    %63 = arith.truncf %45 : vector<2x8x16xf32> to vector<2x8x16xbf16>
    "tpu.trace_start"() <{level = 10 : i32, message = "bqk,bkd->bqd"}> : () -> ()
    %cst_19 = arith.constant dense<0.000000e+00> : vector<2x8x16xf32>
    %64 = tpu.matmul %62, %63, %cst_19 {dimension_numbers = #tpu.dot_dimension_numbers<[2], [1], [1], [2], [0, 0, 0, 1, 1, 2], [0], [0]>} : vector<2x8x8xbf16>, vector<2x8x16xbf16>, vector<2x8x16xf32> -> vector<2x8x16xf32>
    "tpu.trace_stop"() : () -> ()
    %65 = vector.shape_cast %64 : vector<2x8x16xf32> to vector<16x16xf32>
    %66 = arith.truncf %65 : vector<16x16xf32> to vector<16x16xbf16>
    %c1 = arith.constant 1 : index
    %c0_20 = arith.constant 0 : index
    %c0_21 = arith.constant 0 : index
    %67 = vector.load %arg4[%c1, %c0_20, %c0_21] : memref<2x16x32xbf16, #tpu.memory_space<vmem>>, vector<1x16x32xbf16>
    %68 = vector.shape_cast %67 : vector<1x16x32xbf16> to vector<16x32xbf16>
    %cst_22 = arith.constant dense<0.000000e+00> : vector<16x32xf32>
    %69 = tpu.matmul %66, %68, %cst_22 {dimension_numbers = #tpu.dot_dimension_numbers<[1], [0], [0], [1], [0, 0, 1, 1], [], []>} : vector<16x16xbf16>, vector<16x32xbf16>, vector<16x32xf32> -> vector<16x32xf32>
    %70 = arith.addf %39, %69 : vector<16x32xf32>
    %c0_23 = arith.constant 0 : index
    %c0_24 = arith.constant 0 : index
    %71 = vector.load %arg5[%c0_23, %c0_24] : memref<1x32xf32, #tpu.memory_space<vmem>>, vector<1x32xf32>
    %72 = vector.broadcast %71 : vector<1x32xf32> to vector<16x32xf32>
    %73 = arith.addf %70, %72 : vector<16x32xf32>
    %74 = arith.addf %73, %0 : vector<16x32xf32>
    %c0_25 = arith.constant 0 : index
    %c0_26 = arith.constant 0 : index
    %75 = vector.load %arg6[%c0_25, %c0_26] : memref<1x32xf32, #tpu.memory_space<vmem>>, vector<1x32xf32>
    %c0_27 = arith.constant 0 : index
    %c0_28 = arith.constant 0 : index
    %76 = vector.load %arg7[%c0_27, %c0_28] : memref<1x32xf32, #tpu.memory_space<vmem>>, vector<1x32xf32>
    %cst_29 = arith.constant dense<0.000000e+00> : vector<16xf32>
    %77 = vector.multi_reduction <add>, %74, %cst_29 [1] : vector<16x32xf32> to vector<16xf32>
    %78 = vector.shape_cast %77 : vector<16xf32> to vector<16x1xf32>
    %cst_30 = arith.constant 3.200000e+01 : f32
    %79 = vector.broadcast %cst_30 : f32 to vector<16x1xf32>
    %80 = arith.divf %78, %79 : vector<16x1xf32>
    %81 = vector.broadcast %80 : vector<16x1xf32> to vector<16x32xf32>
    %82 = arith.subf %74, %81 : vector<16x32xf32>
    %83 = arith.mulf %82, %82 : vector<16x32xf32>
    %cst_31 = arith.constant dense<0.000000e+00> : vector<16xf32>
    %84 = vector.multi_reduction <add>, %83, %cst_31 [1] : vector<16x32xf32> to vector<16xf32>
    %85 = vector.shape_cast %84 : vector<16xf32> to vector<16x1xf32>
    %cst_32 = arith.constant 3.200000e+01 : f32
    %86 = vector.broadcast %cst_32 : f32 to vector<16x1xf32>
    %87 = arith.divf %85, %86 : vector<16x1xf32>
    %88 = vector.broadcast %80 : vector<16x1xf32> to vector<16x32xf32>
    %89 = arith.subf %74, %88 : vector<16x32xf32>
    %cst_33 = arith.constant 9.99999974E-6 : f32
    %90 = vector.broadcast %cst_33 : f32 to vector<16x1xf32>
    %91 = arith.addf %87, %90 : vector<16x1xf32>
    %92 = math.rsqrt %91 : vector<16x1xf32>
    %93 = vector.broadcast %92 : vector<16x1xf32> to vector<16x32xf32>
    %94 = arith.mulf %89, %93 : vector<16x32xf32>
    %95 = vector.broadcast %75 : vector<1x32xf32> to vector<16x32xf32>
    %96 = arith.mulf %94, %95 : vector<16x32xf32>
    %97 = vector.broadcast %76 : vector<1x32xf32> to vector<16x32xf32>
    %98 = arith.addf %96, %97 : vector<16x32xf32>
    %99 = arith.truncf %98 : vector<16x32xf32> to vector<16x32xbf16>
    %c0_34 = arith.constant 0 : index
    %c0_35 = arith.constant 0 : index
    %100 = vector.load %arg8[%c0_34, %c0_35] : memref<32x64xbf16, #tpu.memory_space<vmem>>, vector<32x64xbf16>
    %cst_36 = arith.constant dense<0.000000e+00> : vector<16x64xf32>
    %101 = tpu.matmul %99, %100, %cst_36 {dimension_numbers = #tpu.dot_dimension_numbers<[1], [0], [0], [1], [0, 0, 1, 1], [], []>} : vector<16x32xbf16>, vector<32x64xbf16>, vector<16x64xf32> -> vector<16x64xf32>
    %c0_37 = arith.constant 0 : index
    %c0_38 = arith.constant 0 : index
    %102 = vector.load %arg9[%c0_37, %c0_38] : memref<1x64xf32, #tpu.memory_space<vmem>>, vector<1x64xf32>
    %103 = vector.broadcast %102 : vector<1x64xf32> to vector<16x64xf32>
    %104 = arith.addf %101, %103 : vector<16x64xf32>
    %105 = arith.mulf %104, %104 : vector<16x64xf32>
    %106 = arith.mulf %104, %105 : vector<16x64xf32>
    %cst_39 = arith.constant 4.471500e-02 : f32
    %107 = vector.broadcast %cst_39 : f32 to vector<16x64xf32>
    %108 = arith.mulf %107, %106 : vector<16x64xf32>
    %109 = arith.addf %104, %108 : vector<16x64xf32>
    %cst_40 = arith.constant 0.797884583 : f32
    %110 = vector.broadcast %cst_40 : f32 to vector<16x64xf32>
    %111 = arith.mulf %110, %109 : vector<16x64xf32>
    %112 = math.tanh %111 : vector<16x64xf32>
    %cst_41 = arith.constant 1.000000e+00 : f32
    %113 = vector.broadcast %cst_41 : f32 to vector<16x64xf32>
    %114 = arith.addf %113, %112 : vector<16x64xf32>
    %cst_42 = arith.constant 5.000000e-01 : f32
    %115 = vector.broadcast %cst_42 : f32 to vector<16x64xf32>
    %116 = arith.mulf %115, %114 : vector<16x64xf32>
    %117 = arith.mulf %104, %116 : vector<16x64xf32>
    %118 = arith.truncf %117 : vector<16x64xf32> to vector<16x64xbf16>
    %c0_43 = arith.constant 0 : index
    %c0_44 = arith.constant 0 : index
    %119 = vector.load %arg10[%c0_43, %c0_44] : memref<64x32xbf16, #tpu.memory_space<vmem>>, vector<64x32xbf16>
    %cst_45 = arith.constant dense<0.000000e+00> : vector<16x32xf32>
    %120 = tpu.matmul %118, %119, %cst_45 {dimension_numbers = #tpu.dot_dimension_numbers<[1], [0], [0], [1], [0, 0, 1, 1], [], []>} : vector<16x64xbf16>, vector<64x32xbf16>, vector<16x32xf32> -> vector<16x32xf32>
    %c0_46 = arith.constant 0 : index
    %c0_47 = arith.constant 0 : index
    %121 = vector.load %arg11[%c0_46, %c0_47] : memref<1x32xf32, #tpu.memory_space<vmem>>, vector<1x32xf32>
    %122 = vector.broadcast %121 : vector<1x32xf32> to vector<16x32xf32>
    %123 = arith.addf %120, %122 : vector<16x32xf32>
    %124 = arith.addf %123, %98 : vector<16x32xf32>
    %c0_48 = arith.constant 0 : index
    %c0_49 = arith.constant 0 : index
    %125 = vector.load %arg12[%c0_48, %c0_49] : memref<1x32xf32, #tpu.memory_space<vmem>>, vector<1x32xf32>
    %c0_50 = arith.constant 0 : index
    %c0_51 = arith.constant 0 : index
    %126 = vector.load %arg13[%c0_50, %c0_51] : memref<1x32xf32, #tpu.memory_space<vmem>>, vector<1x32xf32>
    %cst_52 = arith.constant dense<0.000000e+00> : vector<16xf32>
    %127 = vector.multi_reduction <add>, %124, %cst_52 [1] : vector<16x32xf32> to vector<16xf32>
    %128 = vector.shape_cast %127 : vector<16xf32> to vector<16x1xf32>
    %cst_53 = arith.constant 3.200000e+01 : f32
    %129 = vector.broadcast %cst_53 : f32 to vector<16x1xf32>
    %130 = arith.divf %128, %129 : vector<16x1xf32>
    %131 = vector.broadcast %130 : vector<16x1xf32> to vector<16x32xf32>
    %132 = arith.subf %124, %131 : vector<16x32xf32>
    %133 = arith.mulf %132, %132 : vector<16x32xf32>
    %cst_54 = arith.constant dense<0.000000e+00> : vector<16xf32>
    %134 = vector.multi_reduction <add>, %133, %cst_54 [1] : vector<16x32xf32> to vector<16xf32>
    %135 = vector.shape_cast %134 : vector<16xf32> to vector<16x1xf32>
    %cst_55 = arith.constant 3.200000e+01 : f32
    %136 = vector.broadcast %cst_55 : f32 to vector<16x1xf32>
    %137 = arith.divf %135, %136 : vector<16x1xf32>
    %138 = vector.broadcast %130 : vector<16x1xf32> to vector<16x32xf32>
    %139 = arith.subf %124, %138 : vector<16x32xf32>
    %cst_56 = arith.constant 9.99999974E-6 : f32
    %140 = vector.broadcast %cst_56 : f32 to vector<16x1xf32>
    %141 = arith.addf %137, %140 : vector<16x1xf32>
    %142 = math.rsqrt %141 : vector<16x1xf32>
    %143 = vector.broadcast %142 : vector<16x1xf32> to vector<16x32xf32>
    %144 = arith.mulf %139, %143 : vector<16x32xf32>
    %145 = vector.broadcast %125 : vector<1x32xf32> to vector<16x32xf32>
    %146 = arith.mulf %144, %145 : vector<16x32xf32>
    %147 = vector.broadcast %126 : vector<1x32xf32> to vector<16x32xf32>
    %148 = arith.addf %146, %147 : vector<16x32xf32>
    %c0_57 = arith.constant 0 : index
    %c0_58 = arith.constant 0 : index
    %149 = vector.load %arg14[%c0_57, %c0_58] : memref<16x32xf32, #tpu.memory_space<vmem>>, vector<16x32xf32>
    tpu.vector_store %arg14[%c0_57, %c0_58], %148 {strides = array<i32>} : memref<16x32xf32, #tpu.memory_space<vmem>>, vector<16x32xf32>,
    return
  }
}

</mosaic_0001>

<llo_original>
// kernel: roberta_forward.3
$region0: #{roberta_forward.3}
  #allocation0 [shape = 'u32[]', space=smem, size = 0x4, offset = 0x4, fixed_abs, tag = 'smem constant byte address 0x4 - core index']
  #allocation1 [shape = 'u32[144,128]{1,0:T(1,128)}', space=vmem, size = 0x12000, scoped, tag = 'internal scratch']
  %s0 = inlined_call_operand.vmem [shape: f32[16,32], index: 0, kind: input, shape index: {}]
  %s1 = inlined_call_operand.vmem [shape: f32[1,32], index: 1, kind: input, shape index: {}]
  %s2 = inlined_call_operand.vmem [shape: f32[1,32], index: 2, kind: input, shape index: {}]
  %s3 = inlined_call_operand.vmem [shape: f32[16,32], index: 3, kind: output, shape index: {}]
  %s4 = sld [smem:[#allocation0]]
  $region22: #{roberta_forward.3} parent=0
    _
  %s6 = ssub.s32 1, %s4
  %s7 = scalar_select 0, %s6, %s4
  // Predicated region
  $region2: #{roberta_forward.3} parent=0 // pred_check
    _
  $region3: #{roberta_forward.3} parent=0 // pred_check_branch
    %9 = sbr.rel (0) target = $region5
  $region4: #{roberta_forward.3} parent=0 // pred_region
    _
  $region5: #{roberta_forward.3} parent=0 // pred_fallthru
    _
  // Predicated region
  $region6: #{roberta_forward.3} parent=0 // pred_check
    _
  $region7: #{roberta_forward.3} parent=0 // pred_check_branch
    %11 = sbr.rel (0) target = $region9
  $region8: #{roberta_forward.3} parent=0 // pred_region
    _
  $region9: #{roberta_forward.3} parent=0 // pred_fallthru
    _
  // Predicated region
  $region10: #{roberta_forward.3} parent=0 // pred_check
    _
  $region11: #{roberta_forward.3} parent=0 // pred_check_branch
    %13 = sbr.rel (0) target = $region13
  $region12: #{roberta_forward.3} parent=0 // pred_region
    _
  $region13: #{roberta_forward.3} parent=0 // pred_fallthru
    _
  %v14 = vld [vmem:[%s0] sm:$0xff]
  %v15 = vld [vmem:[%s0 + $0x8] sm:$0xff]
  %v16 = vld [vmem:[%s1] sm:$0x1]
  %v17 = vld [vmem:[%s2] sm:$0x1]
  %vm18 = vcmask 261120
  %v19 = vsel %vm18, %v14, 0.0
  %20 = vadd.xlane.f32.xlu0 %v19
  %v21 = vpop.xlane.xlu0 %20
  %v22 = vsel %vm18, %v15, 0.0
  %23 = vadd.xlane.f32.xlu0 %v22
  %v24 = vpop.xlane.xlu0 %23
  %v25 = vrcp.pop 32.0
  %v26 = vmul.f32 %v21, %v25
  %v27 = vmul.f32 %v24, %v25
  %v28 = vsub.f32 %v14, %v26
  %v29 = vsub.f32 %v15, %v27
  %v30 = vmul.f32 %v28, %v28
  %v31 = vmul.f32 %v29, %v29
  %v32 = vsel %vm18, %v30, 0.0
  %33 = vadd.xlane.f32.xlu0 %v32
  %v34 = vpop.xlane.xlu0 %33
  %v35 = vsel %vm18, %v31, 0.0
  %36 = vadd.xlane.f32.xlu0 %v35
  %v37 = vpop.xlane.xlu0 %36
  %v38 = vmul.f32 %v34, %v25
  %v39 = vmul.f32 %v37, %v25
  %v40 = vadd.f32 %v38, 1e-05
  %v41 = vadd.f32 %v39, 1e-05
  %v42 = vrsqrt.pop %v40
  %v43 = vrsqrt.pop %v41
  %v44 = vmul.f32 %v28, %v42
  %v45 = vmul.f32 %v29, %v43
  %v47 = vlaneseq
  %v48 = vshrl.u32 %v47, 7
  %v49 = vsub.s32 0, %v48
  %v50 = vrot.slane %v16, %v49
  %v52 = vmul.f32 %v44, %v50
  %v53 = vmul.f32 %v45, %v50
  %v55 = vlaneseq
  %v56 = vshrl.u32 %v55, 7
  %v57 = vsub.s32 0, %v56
  %v58 = vrot.slane %v17, %v57
  %v60 = vadd.f32 %v52, %v58
  %v61 = vadd.f32 %v53, %v58
  %62 = vst.msk [vmem:[%s3] sm:$0xff] %vm18, %v60
  %63 = vst.msk [vmem:[%s3 + $0x8] sm:$0xff] %vm18, %v61
  // Predicated region
  $region14: #{roberta_forward.3} parent=0 // pred_check
    _
  $region15: #{roberta_forward.3} parent=0 // pred_check_branch
    %65 = sbr.rel (0) target = $region17
  $region16: #{roberta_forward.3} parent=0 // pred_region
    _
  $region17: #{roberta_forward.3} parent=0 // pred_fallthru
    _
  // Predicated region
  $region18: #{roberta_forward.3} parent=0 // pred_check
    _
  $region19: #{roberta_forward.3} parent=0 // pred_check_branch
    %67 = sbr.rel (0) target = $region21
  $region20: #{roberta_forward.3} parent=0 // pred_region
    _
  $region21: #{roberta_forward.3} parent=0 // pred_fallthru
    _

// kernel: roberta_forward.4
$region0: #{roberta_forward.4}
  #allocation0 [shape = 'u32[]', space=smem, size = 0x4, offset = 0x4, fixed_abs, tag = 'smem constant byte address 0x4 - core index']
  #allocation1 [shape = 'u32[144,128]{1,0:T(1,128)}', space=vmem, size = 0x12000, scoped, tag = 'internal scratch']
  %s0 = inlined_call_operand.vmem [shape: f32[16,32], index: 0, kind: input, shape index: {}]
  %s1 = inlined_call_operand.vmem [shape: f32[2,8], index: 1, kind: input, shape index: {}]
  %s2 = inlined_call_operand.vmem [shape: bf16[32,96], index: 2, kind: input, shape index: {}]
  %s3 = inlined_call_operand.vmem [shape: f32[1,96], index: 3, kind: input, shape index: {}]
  %s4 = inlined_call_operand.vmem [shape: bf16[2,16,32], index: 4, kind: input, shape index: {}]
  %s5 = inlined_call_operand.vmem [shape: f32[1,32], index: 5, kind: input, shape index: {}]
  %s6 = inlined_call_operand.vmem [shape: f32[1,32], index: 6, kind: input, shape index: {}]
  %s7 = inlined_call_operand.vmem [shape: f32[1,32], index: 7, kind: input, shape index: {}]
  %s8 = inlined_call_operand.vmem [shape: bf16[32,64], index: 8, kind: input, shape index: {}]
  %s9 = inlined_call_operand.vmem [shape: f32[1,64], index: 9, kind: input, shape index: {}]
  %s10 = inlined_call_operand.vmem [shape: bf16[64,32], index: 10, kind: input, shape index: {}]
  %s11 = inlined_call_operand.vmem [shape: f32[1,32], index: 11, kind: input, shape index: {}]
  %s12 = inlined_call_operand.vmem [shape: f32[1,32], index: 12, kind: input, shape index: {}]
  %s13 = inlined_call_operand.vmem [shape: f32[1,32], index: 13, kind: input, shape index: {}]
  %s14 = inlined_call_operand.vmem [shape: f32[16,32], index: 14, kind: output, shape index: {}]
  %s15 = sld [smem:[#allocation0]]
  $region66: #{roberta_forward.4} parent=0
    _
  %s17 = ssub.s32 1, %s15
  %s18 = scalar_select 0, %s17, %s15
  // Predicated region
  $region2: #{roberta_forward.4} parent=0 // pred_check
    _
  $region3: #{roberta_forward.4} parent=0 // pred_check_branch
    %20 = sbr.rel (0) target = $region5
  $region4: #{roberta_forward.4} parent=0 // pred_region
    _
  $region5: #{roberta_forward.4} parent=0 // pred_fallthru
    _
  // Predicated region
  $region6: #{roberta_forward.4} parent=0 // pred_check
    _
  $region7: #{roberta_forward.4} parent=0 // pred_check_branch
    %22 = sbr.rel (0) target = $region9
  $region8: #{roberta_forward.4} parent=0 // pred_region
    _
  $region9: #{roberta_forward.4} parent=0 // pred_fallthru
    _
  // Predicated region
  $region10: #{roberta_forward.4} parent=0 // pred_check
    _
  $region11: #{roberta_forward.4} parent=0 // pred_check_branch
    %24 = sbr.rel (0) target = $region13
  $region12: #{roberta_forward.4} parent=0 // pred_region
    _
  $region13: #{roberta_forward.4} parent=0 // pred_fallthru
    _
  // Predicated region
  $region14: #{roberta_forward.4} parent=0 // pred_check
    _
  $region15: #{roberta_forward.4} parent=0 // pred_check_branch
    %26 = sbr.rel (0) target = $region17
  $region16: #{roberta_forward.4} parent=0 // pred_region
    _
  $region17: #{roberta_forward.4} parent=0 // pred_fallthru
    _
  // Predicated region
  $region18: #{roberta_forward.4} parent=0 // pred_check
    _
  $region19: #{roberta_forward.4} parent=0 // pred_check_branch
    %28 = sbr.rel (0) target = $region21
  $region20: #{roberta_forward.4} parent=0 // pred_region
    _
  $region21: #{roberta_forward.4} parent=0 // pred_fallthru
    _
  // Predicated region
  $region22: #{roberta_forward.4} parent=0 // pred_check
    _
  $region23: #{roberta_forward.4} parent=0 // pred_check_branch
    %30 = sbr.rel (0) target = $region25
  $region24: #{roberta_forward.4} parent=0 // pred_region
    _
  $region25: #{roberta_forward.4} parent=0 // pred_fallthru
    _
  // Predicated region
  $region26: #{roberta_forward.4} parent=0 // pred_check
    _
  $region27: #{roberta_forward.4} parent=0 // pred_check_branch
    %32 = sbr.rel (0) target = $region29
  $region28: #{roberta_forward.4} parent=0 // pred_region
    _
  $region29: #{roberta_forward.4} parent=0 // pred_fallthru
    _
  // Predicated region
  $region30: #{roberta_forward.4} parent=0 // pred_check
    _
  $region31: #{roberta_forward.4} parent=0 // pred_check_branch
    %34 = sbr.rel (0) target = $region33
  $region32: #{roberta_forward.4} parent=0 // pred_region
    _
  $region33: #{roberta_forward.4} parent=0 // pred_fallthru
    _
  // Predicated region
  $region34: #{roberta_forward.4} parent=0 // pred_check
    _
  $region35: #{roberta_forward.4} parent=0 // pred_check_branch
    %36 = sbr.rel (0) target = $region37
  $region36: #{roberta_forward.4} parent=0 // pred_region
    _
  $region37: #{roberta_forward.4} parent=0 // pred_fallthru
    _
  // Predicated region
  $region38: #{roberta_forward.4} parent=0 // pred_check
    _
  $region39: #{roberta_forward.4} parent=0 // pred_check_branch
    %38 = sbr.rel (0) target = $region41
  $region40: #{roberta_forward.4} parent=0 // pred_region
    _
  $region41: #{roberta_forward.4} parent=0 // pred_fallthru
    _
  // Predicated region
  $region42: #{roberta_forward.4} parent=0 // pred_check
    _
  $region43: #{roberta_forward.4} parent=0 // pred_check_branch
    %40 = sbr.rel (0) target = $region45
  $region44: #{roberta_forward.4} parent=0 // pred_region
    _
  $region45: #{roberta_forward.4} parent=0 // pred_fallthru
    _
  // Predicated region
  $region46: #{roberta_forward.4} parent=0 // pred_check
    _
  $region47: #{roberta_forward.4} parent=0 // pred_check_branch
    %42 = sbr.rel (0) target = $region49
  $region48: #{roberta_forward.4} parent=0 // pred_region
    _
  $region49: #{roberta_forward.4} parent=0 // pred_fallthru
    _
  // Predicated region
  $region50: #{roberta_forward.4} parent=0 // pred_check
    _
  $region51: #{roberta_forward.4} parent=0 // pred_check_branch
    %44 = sbr.rel (0) target = $region53
  $region52: #{roberta_forward.4} parent=0 // pred_region
    _
  $region53: #{roberta_forward.4} parent=0 // pred_fallthru
    _
  // Predicated region
  $region54: #{roberta_forward.4} parent=0 // pred_check
    _
  $region55: #{roberta_forward.4} parent=0 // pred_check_branch
    %46 = sbr.rel (0) target = $region57
  $region56: #{roberta_forward.4} parent=0 // pred_region
    _
  $region57: #{roberta_forward.4} parent=0 // pred_fallthru
    _
  %v48 = vld [vmem:[%s0] sm:$0xff]
  %v49 = vld [vmem:[%s0 + $0x8] sm:$0xff]
  %v50 = vpack.c.bf16 %v49, %v48
  %v51 = vld [vmem:[%s2] sm:$0xf]
  %v52 = vld [vmem:[%s2 + $0x4] sm:$0xf]
  %v53 = vld [vmem:[%s2 + $0x8] sm:$0xf]
  %v54 = vld [vmem:[%s2 + $0xc] sm:$0xf]
  %v55 = vld [vmem:[%s3] sm:$0x1]
  %v57 = vlaneseq
  %v58 = vshrl.u32 %v57, 7
  %v59 = vsub.s32 0, %v58
  %v60 = vrot.slane %v55, %v59
  %v66 = vunpack.c.l.b16 %v51
  %v67 = vunpack.c.l.b16 %v52
  %v68 = vunpack.c.l.b16 %v53
  %v69 = vunpack.c.l.b16 %v54
  %v70 = vpack.c.b16 %v67, %v66
  %v71 = vpack.c.b16 %v69, %v68
  %vm74 = vcmask 261120
  %v76 = vsel %vm74, %v50, 0
  %78 = vmatprep.subr.bf16.mxu0 0
  %79 = vmatpush1.bf16.msra.mxu0 0
  %80 = vmatprep.subr.bf16.mxu0 0
  %81 = vmatpush1.bf16.msra.mxu0 0
  %82 = vmatprep.subr.bf16.mxu0 0
  %83 = vmatpush1.bf16.msra.mxu0 0
  %84 = vmatprep.subr.bf16.mxu0 0
  %85 = vmatpush1.bf16.msra.mxu0 0
  %86 = vmatprep.subr.bf16.mxu0 0
  %87 = vmatpush1.bf16.msra.mxu0 0
  %88 = vmatprep.subr.bf16.mxu0 0
  %89 = vmatpush1.bf16.msra.mxu0 0
  %90 = vmatprep.subr.bf16.mxu0 0
  %91 = vmatpush1.bf16.msra.mxu0 %v71
  %92 = vmatprep.subr.bf16.mxu0 0
  %93 = vmatpush1.bf16.msra.mxu0 %v70
  %94 = vmatprep.subr.bf16.mxu0 0
  %95 = vmatpush2.bf16.msra.mxu0 0
  %96 = vmatprep.subr.bf16.mxu0 0
  %97 = vmatpush2.bf16.msra.mxu0 0
  %98 = vmatprep.subr.bf16.mxu0 0
  %99 = vmatpush2.bf16.msra.mxu0 0
  %100 = vmatprep.subr.bf16.mxu0 0
  %101 = vmatpush2.bf16.msra.mxu0 0
  %102 = vmatprep.subr.bf16.mxu0 0
  %103 = vmatpush2.bf16.msra.mxu0 0
  %104 = vmatprep.subr.bf16.mxu0 0
  %105 = vmatpush2.bf16.msra.mxu0 0
  %106 = vmatprep.subr.bf16.mxu0 0
  %107 = vmatpush2.bf16.msra.mxu0 0
  %108 = vmatprep.subr.bf16.mxu0 0
  %109 = vmatpush2.bf16.msra.mxu0 0
  %110 = vmatprep.mubr.bf16.mxu0 0
  %111 = vmatmul.mubr.bf16.gmra.mxu0 %v76
  %v112 = vpop.f32.mrf.mxu0
  %v113 = vadd.f32 %v60, %v112
  %v114 = vpop.f32.mrf.mxu0
  %v115 = vpop.f32.mrf.mxu0
  %v116 = vadd.f32 %v60, %v115
  %v117 = vpop.f32.mrf.mxu0
  %118 = vdwg.mxu0
  %v119 = vld [vmem:[%s1] sm:$0x3]
  %v120 = vpack.c.bf16 %v113, %v113
  %v121 = vpack.c.bf16 %v116, %v116
  %v124 = vunpack.c.l.s4 1966171168
  %v125 = vunpack.c.0.s8 %v124
  %v126 = vlaneseq
  %v127 = vshrl.u32 %v126, 7
  %v128 = vsub.s32 %v125, %v127
  %v129 = vrot.slane %v119, %v128
  %v130 = vcombine.high %v129, %v129
  %v132 = vunpack.c.l.s4 1966171168
  %v133 = vunpack.c.0.s8 %v132
  %v134 = vlaneseq
  %v135 = vshrl.u32 %v134, 7
  %v136 = vsub.s32 %v133, %v135
  %v137 = vrot.slane %v129, %v136
  %v139 = vunpack.c.l.s4 1966171168
  %v140 = vunpack.c.0.s8 %v139
  %v141 = vlaneseq
  %v142 = vshrl.u32 %v141, 7
  %v143 = vsub.s32 %v140, %v142
  %v144 = vrot.slane %v130, %v143
  %v145 = vlaneseq
  %v146 = vshrl.u32 %v145, 7
  %v147 = vsub.s32 0, %v146
  %v148 = vrot.slane %v137, %v147
  %v149 = vlaneseq
  %v150 = vshrl.u32 %v149, 7
  %v151 = vsub.s32 0, %v150
  %v152 = vrot.slane %v144, %v151
  %156 = vrot.lane.b32.xlu0 %v120, 96
  %v157 = vpop.permute.xlu0 %156
  %vm158 = vcmask 130048
  %v160 = vsel %vm158, %v120, 0
  %v163 = vsel %vm158, %v157, 0
  %165 = vmatprep.subr.bf16.mxu0 0
  %166 = vmatpush1.bf16.xpose.msra.mxu0 0
  %167 = vmatprep.subr.bf16.mxu0 0
  %168 = vmatpush1.bf16.xpose.msra.mxu0 0
  %169 = vmatprep.subr.bf16.mxu0 0
  %170 = vmatpush1.bf16.xpose.msra.mxu0 0
  %171 = vmatprep.subr.bf16.mxu0 0
  %172 = vmatpush1.bf16.xpose.msra.mxu0 0
  %173 = vmatprep.subr.bf16.mxu0 0
  %174 = vmatpush1.bf16.xpose.msra.mxu0 0
  %175 = vmatprep.subr.bf16.mxu0 0
  %176 = vmatpush1.bf16.xpose.msra.mxu0 0
  %177 = vmatprep.subr.bf16.mxu0 0
  %178 = vmatpush1.bf16.xpose.msra.mxu0 0
  %179 = vmatprep.subr.bf16.mxu0 0
  %180 = vmatpush1.bf16.xpose.msra.mxu0 %v163
  %181 = vmatprep.subr.bf16.mxu0 0
  %182 = vmatpush2.bf16.xpose.msra.mxu0 0
  %183 = vmatprep.subr.bf16.mxu0 0
  %184 = vmatpush2.bf16.xpose.msra.mxu0 0
  %185 = vmatprep.subr.bf16.mxu0 0
  %186 = vmatpush2.bf16.xpose.msra.mxu0 0
  %187 = vmatprep.subr.bf16.mxu0 0
  %188 = vmatpush2.bf16.xpose.msra.mxu0 0
  %189 = vmatprep.subr.bf16.mxu0 0
  %190 = vmatpush2.bf16.xpose.msra.mxu0 0
  %191 = vmatprep.subr.bf16.mxu0 0
  %192 = vmatpush2.bf16.xpose.msra.mxu0 0
  %193 = vmatprep.subr.bf16.mxu0 0
  %194 = vmatpush2.bf16.xpose.msra.mxu0 0
  %195 = vmatprep.subr.bf16.mxu0 0
  %196 = vmatpush2.bf16.xpose.msra.mxu0 0
  %197 = vmatprep.mubr.bf16.mxu0 0
  %198 = vmatmul.mubr.bf16.gmra.mxu0 %v160
  %v199 = vpop.f32.mrf.mxu0
  %v200 = vadd.f32 %v148, %v199
  %v201 = vpop.f32.mrf.mxu0
  %v202 = vpop.f32.mrf.mxu0
  %v203 = vpop.f32.mrf.mxu0
  %204 = vdwg.mxu0
  %206 = vrot.lane.b32.xlu0 %v121, 96
  %v207 = vpop.permute.xlu0 %206
  %v209 = vsel %vm158, %v121, 0
  %v212 = vsel %vm158, %v207, 0
  %214 = vmatprep.subr.bf16.mxu0 0
  %215 = vmatpush1.bf16.xpose.msra.mxu0 0
  %216 = vmatprep.subr.bf16.mxu0 0
  %217 = vmatpush1.bf16.xpose.msra.mxu0 0
  %218 = vmatprep.subr.bf16.mxu0 0
  %219 = vmatpush1.bf16.xpose.msra.mxu0 0
  %220 = vmatprep.subr.bf16.mxu0 0
  %221 = vmatpush1.bf16.xpose.msra.mxu0 0
  %222 = vmatprep.subr.bf16.mxu0 0
  %223 = vmatpush1.bf16.xpose.msra.mxu0 0
  %224 = vmatprep.subr.bf16.mxu0 0
  %225 = vmatpush1.bf16.xpose.msra.mxu0 0
  %226 = vmatprep.subr.bf16.mxu0 0
  %227 = vmatpush1.bf16.xpose.msra.mxu0 0
  %228 = vmatprep.subr.bf16.mxu0 0
  %229 = vmatpush1.bf16.xpose.msra.mxu0 %v212
  %230 = vmatprep.subr.bf16.mxu0 0
  %231 = vmatpush2.bf16.xpose.msra.mxu0 0
  %232 = vmatprep.subr.bf16.mxu0 0
  %233 = vmatpush2.bf16.xpose.msra.mxu0 0
  %234 = vmatprep.subr.bf16.mxu0 0
  %235 = vmatpush2.bf16.xpose.msra.mxu0 0
  %236 = vmatprep.subr.bf16.mxu0 0
  %237 = vmatpush2.bf16.xpose.msra.mxu0 0
  %238 = vmatprep.subr.bf16.mxu0 0
  %239 = vmatpush2.bf16.xpose.msra.mxu0 0
  %240 = vmatprep.subr.bf16.mxu0 0
  %241 = vmatpush2.bf16.xpose.msra.mxu0 0
  %242 = vmatprep.subr.bf16.mxu0 0
  %243 = vmatpush2.bf16.xpose.msra.mxu0 0
  %244 = vmatprep.subr.bf16.mxu0 0
  %245 = vmatpush2.bf16.xpose.msra.mxu0 0
  %246 = vmatprep.mubr.bf16.mxu0 0
  %247 = vmatmul.mubr.bf16.gmra.mxu0 %v209
  %v248 = vpop.f32.mrf.mxu0
  %v249 = vadd.f32 %v152, %v248
  %v250 = vpop.f32.mrf.mxu0
  %v251 = vpop.f32.mrf.mxu0
  %v252 = vpop.f32.mrf.mxu0
  %253 = vdwg.mxu0
  %vm254 = vcmask 64512
  %v255 = vsel %vm254, %v200, -inf
  %256 = vmax.xlane.f32.xlu0 %v255
  %v257 = vpop.xlane.xlu0 %256
  %v258 = vsel %vm254, %v249, -inf
  %259 = vmax.xlane.f32.xlu0 %v258
  %v260 = vpop.xlane.xlu0 %259
  %v261 = vsub.f32 %v200, %v257
  %v262 = vsub.f32 %v249, %v260
  %v263 = vmul.f32 %v261, 1.442695
  %v264 = vpow.pop %v263
  %v265 = vmul.f32 %v262, 1.442695
  %v266 = vpow.pop %v265
  %v267 = vsel %vm254, %v264, 0.0
  %268 = vadd.xlane.f32.xlu0 %v267
  %v269 = vpop.xlane.xlu0 %268
  %v270 = vsel %vm254, %v266, 0.0
  %271 = vadd.xlane.f32.xlu0 %v270
  %v272 = vpop.xlane.xlu0 %271
  %v273 = vrcp.pop %v269
  %v274 = vrcp.pop %v272
  %v275 = vmul.f32 %v264, %v273
  %v276 = vmul.f32 %v266, %v274
  %v277 = vpack.c.bf16 %v275, %v275
  %v278 = vpack.c.bf16 %v276, %v276
  %279 = vrot.lane.b32.xlu0 %v120, 64
  %v280 = vpop.permute.xlu0 %279
  %v282 = vsel %vm254, %v277, 0
  %vm284 = vcmask 1043456
  %v286 = vsel %vm284, %v280, 0
  %288 = vmatprep.subr.bf16.mxu0 0
  %289 = vmatpush1.bf16.msra.mxu0 0
  %290 = vmatprep.subr.bf16.mxu0 0
  %291 = vmatpush1.bf16.msra.mxu0 0
  %292 = vmatprep.subr.bf16.mxu0 0
  %293 = vmatpush1.bf16.msra.mxu0 0
  %294 = vmatprep.subr.bf16.mxu0 0
  %295 = vmatpush1.bf16.msra.mxu0 0
  %296 = vmatprep.subr.bf16.mxu0 0
  %297 = vmatpush1.bf16.msra.mxu0 0
  %298 = vmatprep.subr.bf16.mxu0 0
  %299 = vmatpush1.bf16.msra.mxu0 0
  %300 = vmatprep.subr.bf16.mxu0 0
  %301 = vmatpush1.bf16.msra.mxu0 0
  %302 = vmatprep.subr.bf16.mxu0 0
  %303 = vmatpush1.bf16.msra.mxu0 %v286
  %304 = vmatprep.subr.bf16.mxu0 0
  %305 = vmatpush2.bf16.msra.mxu0 0
  %306 = vmatprep.subr.bf16.mxu0 0
  %307 = vmatpush2.bf16.msra.mxu0 0
  %308 = vmatprep.subr.bf16.mxu0 0
  %309 = vmatpush2.bf16.msra.mxu0 0
  %310 = vmatprep.subr.bf16.mxu0 0
  %311 = vmatpush2.bf16.msra.mxu0 0
  %312 = vmatprep.subr.bf16.mxu0 0
  %313 = vmatpush2.bf16.msra.mxu0 0
  %314 = vmatprep.subr.bf16.mxu0 0
  %315 = vmatpush2.bf16.msra.mxu0 0
  %316 = vmatprep.subr.bf16.mxu0 0
  %317 = vmatpush2.bf16.msra.mxu0 0
  %318 = vmatprep.subr.bf16.mxu0 0
  %319 = vmatpush2.bf16.msra.mxu0 0
  %320 = vmatprep.mubr.bf16.mxu0 0
  %321 = vmatmul.mubr.bf16.gmra.mxu0 %v282
  %v322 = vpop.f32.mrf.mxu0
  %v323 = vadd.f32 0.0, %v322
  %v324 = vpop.f32.mrf.mxu0
  %v325 = vpop.f32.mrf.mxu0
  %v326 = vpop.f32.mrf.mxu0
  %327 = vdwg.mxu0
  %328 = vrot.lane.b32.xlu0 %v121, 64
  %v329 = vpop.permute.xlu0 %328
  %v331 = vsel %vm254, %v278, 0
  %v334 = vsel %vm284, %v329, 0
  %336 = vmatprep.subr.bf16.mxu0 0
  %337 = vmatpush1.bf16.msra.mxu0 0
  %338 = vmatprep.subr.bf16.mxu0 0
  %339 = vmatpush1.bf16.msra.mxu0 0
  %340 = vmatprep.subr.bf16.mxu0 0
  %341 = vmatpush1.bf16.msra.mxu0 0
  %342 = vmatprep.subr.bf16.mxu0 0
  %343 = vmatpush1.bf16.msra.mxu0 0
  %344 = vmatprep.subr.bf16.mxu0 0
  %345 = vmatpush1.bf16.msra.mxu0 0
  %346 = vmatprep.subr.bf16.mxu0 0
  %347 = vmatpush1.bf16.msra.mxu0 0
  %348 = vmatprep.subr.bf16.mxu0 0
  %349 = vmatpush1.bf16.msra.mxu0 0
  %350 = vmatprep.subr.bf16.mxu0 0
  %351 = vmatpush1.bf16.msra.mxu0 %v334
  %352 = vmatprep.subr.bf16.mxu0 0
  %353 = vmatpush2.bf16.msra.mxu0 0
  %354 = vmatprep.subr.bf16.mxu0 0
  %355 = vmatpush2.bf16.msra.mxu0 0
  %356 = vmatprep.subr.bf16.mxu0 0
  %357 = vmatpush2.bf16.msra.mxu0 0
  %358 = vmatprep.subr.bf16.mxu0 0
  %359 = vmatpush2.bf16.msra.mxu0 0
  %360 = vmatprep.subr.bf16.mxu0 0
  %361 = vmatpush2.bf16.msra.mxu0 0
  %362 = vmatprep.subr.bf16.mxu0 0
  %363 = vmatpush2.bf16.msra.mxu0 0
  %364 = vmatprep.subr.bf16.mxu0 0
  %365 = vmatpush2.bf16.msra.mxu0 0
  %366 = vmatprep.subr.bf16.mxu0 0
  %367 = vmatpush2.bf16.msra.mxu0 0
  %368 = vmatprep.mubr.bf16.mxu0 0
  %369 = vmatmul.mubr.bf16.gmra.mxu0 %v331
  %v370 = vpop.f32.mrf.mxu0
  %v371 = vadd.f32 0.0, %v370
  %v372 = vpop.f32.mrf.mxu0
  %v373 = vpop.f32.mrf.mxu0
  %v374 = vpop.f32.mrf.mxu0
  %375 = vdwg.mxu0
  %v376 = vpack.c.bf16 %v371, %v323
  %v377 = vld [vmem:[%s4] sm:$0xf]
  %v378 = vld [vmem:[%s4 + $0x4] sm:$0xf]
  %379 = vrot.lane.b32.xlu0 %v120, 112
  %v380 = vpop.permute.xlu0 %379
  %381 = vrot.lane.b32.xlu0 %v120, 80
  %v382 = vpop.permute.xlu0 %381
  %v384 = vsel %vm158, %v380, 0
  %v387 = vsel %vm158, %v382, 0
  %389 = vmatprep.subr.bf16.mxu0 0
  %390 = vmatpush1.bf16.xpose.msra.mxu0 0
  %391 = vmatprep.subr.bf16.mxu0 0
  %392 = vmatpush1.bf16.xpose.msra.mxu0 0
  %393 = vmatprep.subr.bf16.mxu0 0
  %394 = vmatpush1.bf16.xpose.msra.mxu0 0
  %395 = vmatprep.subr.bf16.mxu0 0
  %396 = vmatpush1.bf16.xpose.msra.mxu0 0
  %397 = vmatprep.subr.bf16.mxu0 0
  %398 = vmatpush1.bf16.xpose.msra.mxu0 0
  %399 = vmatprep.subr.bf16.mxu0 0
  %400 = vmatpush1.bf16.xpose.msra.mxu0 0
  %401 = vmatprep.subr.bf16.mxu0 0
  %402 = vmatpush1.bf16.xpose.msra.mxu0 0
  %403 = vmatprep.subr.bf16.mxu0 0
  %404 = vmatpush1.bf16.xpose.msra.mxu0 %v387
  %405 = vmatprep.subr.bf16.mxu0 0
  %406 = vmatpush2.bf16.xpose.msra.mxu0 0
  %407 = vmatprep.subr.bf16.mxu0 0
  %408 = vmatpush2.bf16.xpose.msra.mxu0 0
  %409 = vmatprep.subr.bf16.mxu0 0
  %410 = vmatpush2.bf16.xpose.msra.mxu0 0
  %411 = vmatprep.subr.bf16.mxu0 0
  %412 = vmatpush2.bf16.xpose.msra.mxu0 0
  %413 = vmatprep.subr.bf16.mxu0 0
  %414 = vmatpush2.bf16.xpose.msra.mxu0 0
  %415 = vmatprep.subr.bf16.mxu0 0
  %416 = vmatpush2.bf16.xpose.msra.mxu0 0
  %417 = vmatprep.subr.bf16.mxu0 0
  %418 = vmatpush2.bf16.xpose.msra.mxu0 0
  %419 = vmatprep.subr.bf16.mxu0 0
  %420 = vmatpush2.bf16.xpose.msra.mxu0 0
  %421 = vmatprep.mubr.bf16.mxu0 0
  %422 = vmatmul.mubr.bf16.gmra.mxu0 %v384
  %v423 = vpop.f32.mrf.mxu0
  %v424 = vadd.f32 %v148, %v423
  %v425 = vpop.f32.mrf.mxu0
  %v426 = vpop.f32.mrf.mxu0
  %v427 = vpop.f32.mrf.mxu0
  %428 = vdwg.mxu0
  %429 = vrot.lane.b32.xlu0 %v121, 112
  %v430 = vpop.permute.xlu0 %429
  %431 = vrot.lane.b32.xlu0 %v121, 80
  %v432 = vpop.permute.xlu0 %431
  %v434 = vsel %vm158, %v430, 0
  %v437 = vsel %vm158, %v432, 0
  %439 = vmatprep.subr.bf16.mxu0 0
  %440 = vmatpush1.bf16.xpose.msra.mxu0 0
  %441 = vmatprep.subr.bf16.mxu0 0
  %442 = vmatpush1.bf16.xpose.msra.mxu0 0
  %443 = vmatprep.subr.bf16.mxu0 0
  %444 = vmatpush1.bf16.xpose.msra.mxu0 0
  %445 = vmatprep.subr.bf16.mxu0 0
  %446 = vmatpush1.bf16.xpose.msra.mxu0 0
  %447 = vmatprep.subr.bf16.mxu0 0
  %448 = vmatpush1.bf16.xpose.msra.mxu0 0
  %449 = vmatprep.subr.bf16.mxu0 0
  %450 = vmatpush1.bf16.xpose.msra.mxu0 0
  %451 = vmatprep.subr.bf16.mxu0 0
  %452 = vmatpush1.bf16.xpose.msra.mxu0 0
  %453 = vmatprep.subr.bf16.mxu0 0
  %454 = vmatpush1.bf16.xpose.msra.mxu0 %v437
  %455 = vmatprep.subr.bf16.mxu0 0
  %456 = vmatpush2.bf16.xpose.msra.mxu0 0
  %457 = vmatprep.subr.bf16.mxu0 0
  %458 = vmatpush2.bf16.xpose.msra.mxu0 0
  %459 = vmatprep.subr.bf16.mxu0 0
  %460 = vmatpush2.bf16.xpose.msra.mxu0 0
  %461 = vmatprep.subr.bf16.mxu0 0
  %462 = vmatpush2.bf16.xpose.msra.mxu0 0
  %463 = vmatprep.subr.bf16.mxu0 0
  %464 = vmatpush2.bf16.xpose.msra.mxu0 0
  %465 = vmatprep.subr.bf16.mxu0 0
  %466 = vmatpush2.bf16.xpose.msra.mxu0 0
  %467 = vmatprep.subr.bf16.mxu0 0
  %468 = vmatpush2.bf16.xpose.msra.mxu0 0
  %469 = vmatprep.subr.bf16.mxu0 0
  %470 = vmatpush2.bf16.xpose.msra.mxu0 0
  %471 = vmatprep.mubr.bf16.mxu0 0
  %472 = vmatmul.mubr.bf16.gmra.mxu0 %v434
  %v473 = vpop.f32.mrf.mxu0
  %v474 = vadd.f32 %v152, %v473
  %v475 = vpop.f32.mrf.mxu0
  %v476 = vpop.f32.mrf.mxu0
  %v477 = vpop.f32.mrf.mxu0
  %478 = vdwg.mxu0
  %v479 = vsel %vm254, %v424, -inf
  %480 = vmax.xlane.f32.xlu0 %v479
  %v481 = vpop.xlane.xlu0 %480
  %v482 = vsel %vm254, %v474, -inf
  %483 = vmax.xlane.f32.xlu0 %v482
  %v484 = vpop.xlane.xlu0 %483
  %v485 = vsub.f32 %v424, %v481
  %v486 = vsub.f32 %v474, %v484
  %v487 = vmul.f32 %v485, 1.442695
  %v488 = vpow.pop %v487
  %v489 = vmul.f32 %v486, 1.442695
  %v490 = vpow.pop %v489
  %v491 = vsel %vm254, %v488, 0.0
  %492 = vadd.xlane.f32.xlu0 %v491
  %v493 = vpop.xlane.xlu0 %492
  %v494 = vsel %vm254, %v490, 0.0
  %495 = vadd.xlane.f32.xlu0 %v494
  %v496 = vpop.xlane.xlu0 %495
  %v497 = vrcp.pop %v493
  %v498 = vrcp.pop %v496
  %v499 = vmul.f32 %v488, %v497
  %v500 = vmul.f32 %v490, %v498
  %v501 = vpack.c.bf16 %v499, %v499
  %v502 = vpack.c.bf16 %v500, %v500
  %503 = vrot.lane.b32.xlu0 %v120, 48
  %v504 = vpop.permute.xlu0 %503
  %v506 = vsel %vm254, %v501, 0
  %v509 = vsel %vm284, %v504, 0
  %511 = vmatprep.subr.bf16.mxu0 0
  %512 = vmatpush1.bf16.msra.mxu0 0
  %513 = vmatprep.subr.bf16.mxu0 0
  %514 = vmatpush1.bf16.msra.mxu0 0
  %515 = vmatprep.subr.bf16.mxu0 0
  %516 = vmatpush1.bf16.msra.mxu0 0
  %517 = vmatprep.subr.bf16.mxu0 0
  %518 = vmatpush1.bf16.msra.mxu0 0
  %519 = vmatprep.subr.bf16.mxu0 0
  %520 = vmatpush1.bf16.msra.mxu0 0
  %521 = vmatprep.subr.bf16.mxu0 0
  %522 = vmatpush1.bf16.msra.mxu0 0
  %523 = vmatprep.subr.bf16.mxu0 0
  %524 = vmatpush1.bf16.msra.mxu0 0
  %525 = vmatprep.subr.bf16.mxu0 0
  %526 = vmatpush1.bf16.msra.mxu0 %v509
  %527 = vmatprep.subr.bf16.mxu0 0
  %528 = vmatpush2.bf16.msra.mxu0 0
  %529 = vmatprep.subr.bf16.mxu0 0
  %530 = vmatpush2.bf16.msra.mxu0 0
  %531 = vmatprep.subr.bf16.mxu0 0
  %532 = vmatpush2.bf16.msra.mxu0 0
  %533 = vmatprep.subr.bf16.mxu0 0
  %534 = vmatpush2.bf16.msra.mxu0 0
  %535 = vmatprep.subr.bf16.mxu0 0
  %536 = vmatpush2.bf16.msra.mxu0 0
  %537 = vmatprep.subr.bf16.mxu0 0
  %538 = vmatpush2.bf16.msra.mxu0 0
  %539 = vmatprep.subr.bf16.mxu0 0
  %540 = vmatpush2.bf16.msra.mxu0 0
  %541 = vmatprep.subr.bf16.mxu0 0
  %542 = vmatpush2.bf16.msra.mxu0 0
  %543 = vmatprep.mubr.bf16.mxu0 0
  %544 = vmatmul.mubr.bf16.gmra.mxu0 %v506
  %v545 = vpop.f32.mrf.mxu0
  %v546 = vadd.f32 0.0, %v545
  %v547 = vpop.f32.mrf.mxu0
  %v548 = vpop.f32.mrf.mxu0
  %v549 = vpop.f32.mrf.mxu0
  %550 = vdwg.mxu0
  %551 = vrot.lane.b32.xlu0 %v121, 48
  %v552 = vpop.permute.xlu0 %551
  %v554 = vsel %vm254, %v502, 0
  %v557 = vsel %vm284, %v552, 0
  %559 = vmatprep.subr.bf16.mxu0 0
  %560 = vmatpush1.bf16.msra.mxu0 0
  %561 = vmatprep.subr.bf16.mxu0 0
  %562 = vmatpush1.bf16.msra.mxu0 0
  %563 = vmatprep.subr.bf16.mxu0 0
  %564 = vmatpush1.bf16.msra.mxu0 0
  %565 = vmatprep.subr.bf16.mxu0 0
  %566 = vmatpush1.bf16.msra.mxu0 0
  %567 = vmatprep.subr.bf16.mxu0 0
  %568 = vmatpush1.bf16.msra.mxu0 0
  %569 = vmatprep.subr.bf16.mxu0 0
  %570 = vmatpush1.bf16.msra.mxu0 0
  %571 = vmatprep.subr.bf16.mxu0 0
  %572 = vmatpush1.bf16.msra.mxu0 0
  %573 = vmatprep.subr.bf16.mxu0 0
  %574 = vmatpush1.bf16.msra.mxu0 %v557
  %575 = vmatprep.subr.bf16.mxu0 0
  %576 = vmatpush2.bf16.msra.mxu0 0
  %577 = vmatprep.subr.bf16.mxu0 0
  %578 = vmatpush2.bf16.msra.mxu0 0
  %579 = vmatprep.subr.bf16.mxu0 0
  %580 = vmatpush2.bf16.msra.mxu0 0
  %581 = vmatprep.subr.bf16.mxu0 0
  %582 = vmatpush2.bf16.msra.mxu0 0
  %583 = vmatprep.subr.bf16.mxu0 0
  %584 = vmatpush2.bf16.msra.mxu0 0
  %585 = vmatprep.subr.bf16.mxu0 0
  %586 = vmatpush2.bf16.msra.mxu0 0
  %587 = vmatprep.subr.bf16.mxu0 0
  %588 = vmatpush2.bf16.msra.mxu0 0
  %589 = vmatprep.subr.bf16.mxu0 0
  %590 = vmatpush2.bf16.msra.mxu0 0
  %591 = vmatprep.mubr.bf16.mxu0 0
  %592 = vmatmul.mubr.bf16.gmra.mxu0 %v554
  %v593 = vpop.f32.mrf.mxu0
  %v594 = vadd.f32 0.0, %v593
  %v595 = vpop.f32.mrf.mxu0
  %v596 = vpop.f32.mrf.mxu0
  %v597 = vpop.f32.mrf.mxu0
  %598 = vdwg.mxu0
  %v599 = vpack.c.bf16 %v594, %v546
  %s600 = scalar_lea.vmem %s4, 8
  %v601 = vld [vmem:[%s600] sm:$0xf]
  %v602 = vld [vmem:[%s600 + $0x4] sm:$0xf]
  %v605 = vunpack.c.l.b16 %v601
  %v606 = vunpack.c.l.b16 %v602
  %v607 = vpack.c.b16 %v606, %v605
  %v610 = vsel %vm158, %v599, 0
  %612 = vmatprep.subr.bf16.mxu0 0
  %613 = vmatpush1.bf16.msra.mxu0 0
  %614 = vmatprep.subr.bf16.mxu0 0
  %615 = vmatpush1.bf16.msra.mxu0 0
  %616 = vmatprep.subr.bf16.mxu0 0
  %617 = vmatpush1.bf16.msra.mxu0 0
  %618 = vmatprep.subr.bf16.mxu0 0
  %619 = vmatpush1.bf16.msra.mxu0 0
  %620 = vmatprep.subr.bf16.mxu0 0
  %621 = vmatpush1.bf16.msra.mxu0 0
  %622 = vmatprep.subr.bf16.mxu0 0
  %623 = vmatpush1.bf16.msra.mxu0 0
  %624 = vmatprep.subr.bf16.mxu0 0
  %625 = vmatpush1.bf16.msra.mxu0 0
  %626 = vmatprep.subr.bf16.mxu0 0
  %627 = vmatpush1.bf16.msra.mxu0 %v607
  %628 = vmatprep.subr.bf16.mxu0 0
  %629 = vmatpush2.bf16.msra.mxu0 0
  %630 = vmatprep.subr.bf16.mxu0 0
  %631 = vmatpush2.bf16.msra.mxu0 0
  %632 = vmatprep.subr.bf16.mxu0 0
  %633 = vmatpush2.bf16.msra.mxu0 0
  %634 = vmatprep.subr.bf16.mxu0 0
  %635 = vmatpush2.bf16.msra.mxu0 0
  %636 = vmatprep.subr.bf16.mxu0 0
  %637 = vmatpush2.bf16.msra.mxu0 0
  %638 = vmatprep.subr.bf16.mxu0 0
  %639 = vmatpush2.bf16.msra.mxu0 0
  %640 = vmatprep.subr.bf16.mxu0 0
  %641 = vmatpush2.bf16.msra.mxu0 0
  %642 = vmatprep.subr.bf16.mxu0 0
  %643 = vmatpush2.bf16.msra.mxu0 0
  %644 = vmatprep.mubr.bf16.mxu0 0
  %645 = vmatmul.mubr.bf16.gmra.mxu0 %v610
  %v646 = vpop.f32.mrf.mxu0
  %v647 = vadd.f32 0.0, %v646
  %v648 = vpop.f32.mrf.mxu0
  %v649 = vpop.f32.mrf.mxu0
  %v650 = vadd.f32 0.0, %v649
  %v651 = vpop.f32.mrf.mxu0
  %652 = vdwg.mxu0
  %v655 = vunpack.c.l.b16 %v377
  %v656 = vunpack.c.l.b16 %v378
  %v657 = vpack.c.b16 %v656, %v655
  %v660 = vsel %vm158, %v376, 0
  %662 = vmatprep.subr.bf16.mxu0 0
  %663 = vmatpush1.bf16.msra.mxu0 0
  %664 = vmatprep.subr.bf16.mxu0 0
  %665 = vmatpush1.bf16.msra.mxu0 0
  %666 = vmatprep.subr.bf16.mxu0 0
  %667 = vmatpush1.bf16.msra.mxu0 0
  %668 = vmatprep.subr.bf16.mxu0 0
  %669 = vmatpush1.bf16.msra.mxu0 0
  %670 = vmatprep.subr.bf16.mxu0 0
  %671 = vmatpush1.bf16.msra.mxu0 0
  %672 = vmatprep.subr.bf16.mxu0 0
  %673 = vmatpush1.bf16.msra.mxu0 0
  %674 = vmatprep.subr.bf16.mxu0 0
  %675 = vmatpush1.bf16.msra.mxu0 0
  %676 = vmatprep.subr.bf16.mxu0 0
  %677 = vmatpush1.bf16.msra.mxu0 %v657
  %678 = vmatprep.subr.bf16.mxu0 0
  %679 = vmatpush2.bf16.msra.mxu0 0
  %680 = vmatprep.subr.bf16.mxu0 0
  %681 = vmatpush2.bf16.msra.mxu0 0
  %682 = vmatprep.subr.bf16.mxu0 0
  %683 = vmatpush2.bf16.msra.mxu0 0
  %684 = vmatprep.subr.bf16.mxu0 0
  %685 = vmatpush2.bf16.msra.mxu0 0
  %686 = vmatprep.subr.bf16.mxu0 0
  %687 = vmatpush2.bf16.msra.mxu0 0
  %688 = vmatprep.subr.bf16.mxu0 0
  %689 = vmatpush2.bf16.msra.mxu0 0
  %690 = vmatprep.subr.bf16.mxu0 0
  %691 = vmatpush2.bf16.msra.mxu0 0
  %692 = vmatprep.subr.bf16.mxu0 0
  %693 = vmatpush2.bf16.msra.mxu0 0
  %694 = vmatprep.mubr.bf16.mxu0 0
  %695 = vmatmul.mubr.bf16.gmra.mxu0 %v660
  %v696 = vpop.f32.mrf.mxu0
  %v697 = vadd.f32 %v647, %v696
  %v698 = vpop.f32.mrf.mxu0
  %v699 = vpop.f32.mrf.mxu0
  %v700 = vadd.f32 %v650, %v699
  %v701 = vpop.f32.mrf.mxu0
  %702 = vdwg.mxu0
  %v703 = vld [vmem:[%s5] sm:$0x1]
  %v705 = vlaneseq
  %v706 = vshrl.u32 %v705, 7
  %v707 = vsub.s32 0, %v706
  %v708 = vrot.slane %v703, %v707
  %v710 = vadd.f32 %v697, %v708
  %v711 = vadd.f32 %v700, %v708
  %v712 = vadd.f32 %v710, %v48
  %v713 = vadd.f32 %v711, %v49
  %v714 = vld [vmem:[%s6] sm:$0x1]
  %v715 = vld [vmem:[%s7] sm:$0x1]
  %v716 = vsel %vm74, %v712, 0.0
  %717 = vadd.xlane.f32.xlu0 %v716
  %v718 = vpop.xlane.xlu0 %717
  %v719 = vsel %vm74, %v713, 0.0
  %720 = vadd.xlane.f32.xlu0 %v719
  %v721 = vpop.xlane.xlu0 %720
  %v722 = vrcp.pop 32.0
  %v723 = vmul.f32 %v718, %v722
  %v724 = vmul.f32 %v721, %v722
  %v725 = vsub.f32 %v712, %v723
  %v726 = vsub.f32 %v713, %v724
  %v727 = vmul.f32 %v725, %v725
  %v728 = vmul.f32 %v726, %v726
  %v729 = vsel %vm74, %v727, 0.0
  %730 = vadd.xlane.f32.xlu0 %v729
  %v731 = vpop.xlane.xlu0 %730
  %v732 = vsel %vm74, %v728, 0.0
  %733 = vadd.xlane.f32.xlu0 %v732
  %v734 = vpop.xlane.xlu0 %733
  %v735 = vmul.f32 %v731, %v722
  %v736 = vmul.f32 %v734, %v722
  %v737 = vadd.f32 %v735, 1e-05
  %v738 = vadd.f32 %v736, 1e-05
  %v739 = vrsqrt.pop %v737
  %v740 = vrsqrt.pop %v738
  %v741 = vmul.f32 %v725, %v739
  %v742 = vmul.f32 %v726, %v740
  %v744 = vlaneseq
  %v745 = vshrl.u32 %v744, 7
  %v746 = vsub.s32 0, %v745
  %v747 = vrot.slane %v714, %v746
  %v749 = vmul.f32 %v741, %v747
  %v750 = vmul.f32 %v742, %v747
  %v752 = vlaneseq
  %v753 = vshrl.u32 %v752, 7
  %v754 = vsub.s32 0, %v753
  %v755 = vrot.slane %v715, %v754
  %v757 = vadd.f32 %v749, %v755
  %v758 = vadd.f32 %v750, %v755
  %v759 = vpack.c.bf16 %v758, %v757
  %v760 = vld [vmem:[%s8] sm:$0xf]
  %v761 = vld [vmem:[%s8 + $0x4] sm:$0xf]
  %v762 = vld [vmem:[%s8 + $0x8] sm:$0xf]
  %v763 = vld [vmem:[%s8 + $0xc] sm:$0xf]
  %v764 = vld [vmem:[%s9] sm:$0x1]
  %v766 = vlaneseq
  %v767 = vshrl.u32 %v766, 7
  %v768 = vsub.s32 0, %v767
  %v769 = vrot.slane %v764, %v768
  %v775 = vunpack.c.l.b16 %v760
  %v776 = vunpack.c.l.b16 %v761
  %v777 = vunpack.c.l.b16 %v762
  %v778 = vunpack.c.l.b16 %v763
  %v779 = vpack.c.b16 %v776, %v775
  %v780 = vpack.c.b16 %v778, %v777
  %v784 = vsel %vm74, %v759, 0
  %786 = vmatprep.subr.bf16.mxu0 0
  %787 = vmatpush1.bf16.msra.mxu0 0
  %788 = vmatprep.subr.bf16.mxu0 0
  %789 = vmatpush1.bf16.msra.mxu0 0
  %790 = vmatprep.subr.bf16.mxu0 0
  %791 = vmatpush1.bf16.msra.mxu0 0
  %792 = vmatprep.subr.bf16.mxu0 0
  %793 = vmatpush1.bf16.msra.mxu0 0
  %794 = vmatprep.subr.bf16.mxu0 0
  %795 = vmatpush1.bf16.msra.mxu0 0
  %796 = vmatprep.subr.bf16.mxu0 0
  %797 = vmatpush1.bf16.msra.mxu0 0
  %798 = vmatprep.subr.bf16.mxu0 0
  %799 = vmatpush1.bf16.msra.mxu0 %v780
  %800 = vmatprep.subr.bf16.mxu0 0
  %801 = vmatpush1.bf16.msra.mxu0 %v779
  %802 = vmatprep.subr.bf16.mxu0 0
  %803 = vmatpush2.bf16.msra.mxu0 0
  %804 = vmatprep.subr.bf16.mxu0 0
  %805 = vmatpush2.bf16.msra.mxu0 0
  %806 = vmatprep.subr.bf16.mxu0 0
  %807 = vmatpush2.bf16.msra.mxu0 0
  %808 = vmatprep.subr.bf16.mxu0 0
  %809 = vmatpush2.bf16.msra.mxu0 0
  %810 = vmatprep.subr.bf16.mxu0 0
  %811 = vmatpush2.bf16.msra.mxu0 0
  %812 = vmatprep.subr.bf16.mxu0 0
  %813 = vmatpush2.bf16.msra.mxu0 0
  %814 = vmatprep.subr.bf16.mxu0 0
  %815 = vmatpush2.bf16.msra.mxu0 0
  %816 = vmatprep.subr.bf16.mxu0 0
  %817 = vmatpush2.bf16.msra.mxu0 0
  %818 = vmatprep.mubr.bf16.mxu0 0
  %819 = vmatmul.mubr.bf16.gmra.mxu0 %v784
  %v820 = vpop.f32.mrf.mxu0
  %v821 = vadd.f32 %v769, %v820
  %v822 = vpop.f32.mrf.mxu0
  %v823 = vpop.f32.mrf.mxu0
  %v824 = vadd.f32 %v769, %v823
  %v825 = vpop.f32.mrf.mxu0
  %826 = vdwg.mxu0
  %v827 = vmul.f32 %v821, %v821
  %v828 = vmul.f32 %v824, %v824
  %v829 = vmul.f32 %v821, %v827
  %v830 = vmul.f32 %v824, %v828
  %v831 = vmul.f32 %v829, 0.044715
  %v832 = vmul.f32 %v830, 0.044715
  %v833 = vadd.f32 %v821, %v831
  %v834 = vadd.f32 %v824, %v832
  %v835 = vmul.f32 %v833, 0.7978846
  %v836 = vmul.f32 %v834, 0.7978846
  %v837 = vtanh.pop %v835
  %v838 = vtanh.pop %v836
  %v839 = vadd.f32 %v837, 1.0
  %v840 = vadd.f32 %v838, 1.0
  %v841 = vmul.f32 %v839, 0.5
  %v842 = vmul.f32 %v840, 0.5
  %v843 = vmul.f32 %v821, %v841
  %v844 = vmul.f32 %v824, %v842
  %v845 = vpack.c.bf16 %v844, %v843
  %v846 = vld [vmem:[%s10] sm:$0xf]
  %v847 = vld [vmem:[%s10 + $0x4] sm:$0xf]
  %v848 = vld [vmem:[%s10 + $0x8] sm:$0xf]
  %v849 = vld [vmem:[%s10 + $0xc] sm:$0xf]
  %v850 = vld [vmem:[%s10 + $0x10] sm:$0xf]
  %v851 = vld [vmem:[%s10 + $0x14] sm:$0xf]
  %v852 = vld [vmem:[%s10 + $0x18] sm:$0xf]
  %v853 = vld [vmem:[%s10 + $0x1c] sm:$0xf]
  %v854 = vld [vmem:[%s11] sm:$0x1]
  %v856 = vlaneseq
  %v857 = vshrl.u32 %v856, 7
  %v858 = vsub.s32 0, %v857
  %v859 = vrot.slane %v854, %v858
  %v869 = vunpack.c.l.b16 %v846
  %v870 = vunpack.c.l.b16 %v847
  %v871 = vunpack.c.l.b16 %v848
  %v872 = vunpack.c.l.b16 %v849
  %v873 = vunpack.c.l.b16 %v850
  %v874 = vunpack.c.l.b16 %v851
  %v875 = vunpack.c.l.b16 %v852
  %v876 = vunpack.c.l.b16 %v853
  %v877 = vpack.c.b16 %v870, %v869
  %v878 = vpack.c.b16 %v872, %v871
  %v879 = vpack.c.b16 %v874, %v873
  %v880 = vpack.c.b16 %v876, %v875
  %vm885 = vcmask 523264
  %v887 = vsel %vm885, %v845, 0
  %889 = vmatprep.subr.bf16.mxu0 0
  %890 = vmatpush1.bf16.msra.mxu0 0
  %891 = vmatprep.subr.bf16.mxu0 0
  %892 = vmatpush1.bf16.msra.mxu0 0
  %893 = vmatprep.subr.bf16.mxu0 0
  %894 = vmatpush1.bf16.msra.mxu0 0
  %895 = vmatprep.subr.bf16.mxu0 0
  %896 = vmatpush1.bf16.msra.mxu0 0
  %897 = vmatprep.subr.bf16.mxu0 0
  %898 = vmatpush1.bf16.msra.mxu0 %v880
  %899 = vmatprep.subr.bf16.mxu0 0
  %900 = vmatpush1.bf16.msra.mxu0 %v879
  %901 = vmatprep.subr.bf16.mxu0 0
  %902 = vmatpush1.bf16.msra.mxu0 %v878
  %903 = vmatprep.subr.bf16.mxu0 0
  %904 = vmatpush1.bf16.msra.mxu0 %v877
  %905 = vmatprep.subr.bf16.mxu0 0
  %906 = vmatpush2.bf16.msra.mxu0 0
  %907 = vmatprep.subr.bf16.mxu0 0
  %908 = vmatpush2.bf16.msra.mxu0 0
  %909 = vmatprep.subr.bf16.mxu0 0
  %910 = vmatpush2.bf16.msra.mxu0 0
  %911 = vmatprep.subr.bf16.mxu0 0
  %912 = vmatpush2.bf16.msra.mxu0 0
  %913 = vmatprep.subr.bf16.mxu0 0
  %914 = vmatpush2.bf16.msra.mxu0 0
  %915 = vmatprep.subr.bf16.mxu0 0
  %916 = vmatpush2.bf16.msra.mxu0 0
  %917 = vmatprep.subr.bf16.mxu0 0
  %918 = vmatpush2.bf16.msra.mxu0 0
  %919 = vmatprep.subr.bf16.mxu0 0
  %920 = vmatpush2.bf16.msra.mxu0 0
  %921 = vmatprep.mubr.bf16.mxu0 0
  %922 = vmatmul.mubr.bf16.gmra.mxu0 %v887
  %v923 = vpop.f32.mrf.mxu0
  %v924 = vadd.f32 %v859, %v923
  %v925 = vpop.f32.mrf.mxu0
  %v926 = vpop.f32.mrf.mxu0
  %v927 = vadd.f32 %v859, %v926
  %v928 = vpop.f32.mrf.mxu0
  %929 = vdwg.mxu0
  %v930 = vadd.f32 %v924, %v757
  %v931 = vadd.f32 %v927, %v758
  %v932 = vld [vmem:[%s12] sm:$0x1]
  %v933 = vld [vmem:[%s13] sm:$0x1]
  %v934 = vsel %vm74, %v930, 0.0
  %935 = vadd.xlane.f32.xlu0 %v934
  %v936 = vpop.xlane.xlu0 %935
  %v937 = vsel %vm74, %v931, 0.0
  %938 = vadd.xlane.f32.xlu0 %v937
  %v939 = vpop.xlane.xlu0 %938
  %v940 = vmul.f32 %v936, %v722
  %v941 = vmul.f32 %v939, %v722
  %v942 = vsub.f32 %v930, %v940
  %v943 = vsub.f32 %v931, %v941
  %v944 = vmul.f32 %v942, %v942
  %v945 = vmul.f32 %v943, %v943
  %v946 = vsel %vm74, %v944, 0.0
  %947 = vadd.xlane.f32.xlu0 %v946
  %v948 = vpop.xlane.xlu0 %947
  %v949 = vsel %vm74, %v945, 0.0
  %950 = vadd.xlane.f32.xlu0 %v949
  %v951 = vpop.xlane.xlu0 %950
  %v952 = vmul.f32 %v948, %v722
  %v953 = vmul.f32 %v951, %v722
  %v954 = vadd.f32 %v952, 1e-05
  %v955 = vadd.f32 %v953, 1e-05
  %v956 = vrsqrt.pop %v954
  %v957 = vrsqrt.pop %v955
  %v958 = vmul.f32 %v942, %v956
  %v959 = vmul.f32 %v943, %v957
  %v961 = vlaneseq
  %v962 = vshrl.u32 %v961, 7
  %v963 = vsub.s32 0, %v962
  %v964 = vrot.slane %v932, %v963
  %v966 = vmul.f32 %v958, %v964
  %v967 = vmul.f32 %v959, %v964
  %v969 = vlaneseq
  %v970 = vshrl.u32 %v969, 7
  %v971 = vsub.s32 0, %v970
  %v972 = vrot.slane %v933, %v971
  %v974 = vadd.f32 %v966, %v972
  %v975 = vadd.f32 %v967, %v972
  %976 = vst.msk [vmem:[%s14] sm:$0xff] %vm74, %v974
  %977 = vst.msk [vmem:[%s14 + $0x8] sm:$0xff] %vm74, %v975
  // Predicated region
  $region58: #{roberta_forward.4} parent=0 // pred_check
    _
  $region59: #{roberta_forward.4} parent=0 // pred_check_branch
    %979 = sbr.rel (0) target = $region61
  $region60: #{roberta_forward.4} parent=0 // pred_region
    _
  $region61: #{roberta_forward.4} parent=0 // pred_fallthru
    _
  // Predicated region
  $region62: #{roberta_forward.4} parent=0 // pred_check
    _
  $region63: #{roberta_forward.4} parent=0 // pred_check_branch
    %981 = sbr.rel (0) target = $region65
  $region64: #{roberta_forward.4} parent=0 // pred_region
    _
  $region65: #{roberta_forward.4} parent=0 // pred_fallthru
    _

// kernel: roberta_forward.5
$region0: #{roberta_forward.5}
  #allocation0 [shape = 'u32[]', space=smem, size = 0x4, offset = 0x4, fixed_abs, tag = 'smem constant byte address 0x4 - core index']
  #allocation1 [shape = 'u32[144,128]{1,0:T(1,128)}', space=vmem, size = 0x12000, scoped, tag = 'internal scratch']
  %s0 = inlined_call_operand.vmem [shape: f32[16,32], index: 0, kind: input, shape index: {}]
  %s1 = inlined_call_operand.vmem [shape: f32[2,8], index: 1, kind: input, shape index: {}]
  %s2 = inlined_call_operand.vmem [shape: bf16[32,96], index: 2, kind: input, shape index: {}]
  %s3 = inlined_call_operand.vmem [shape: f32[1,96], index: 3, kind: input, shape index: {}]
  %s4 = inlined_call_operand.vmem [shape: bf16[2,16,32], index: 4, kind: input, shape index: {}]
  %s5 = inlined_call_operand.vmem [shape: f32[1,32], index: 5, kind: input, shape index: {}]
  %s6 = inlined_call_operand.vmem [shape: f32[1,32], index: 6, kind: input, shape index: {}]
  %s7 = inlined_call_operand.vmem [shape: f32[1,32], index: 7, kind: input, shape index: {}]
  %s8 = inlined_call_operand.vmem [shape: bf16[32,64], index: 8, kind: input, shape index: {}]
  %s9 = inlined_call_operand.vmem [shape: f32[1,64], index: 9, kind: input, shape index: {}]
  %s10 = inlined_call_operand.vmem [shape: bf16[64,32], index: 10, kind: input, shape index: {}]
  %s11 = inlined_call_operand.vmem [shape: f32[1,32], index: 11, kind: input, shape index: {}]
  %s12 = inlined_call_operand.vmem [shape: f32[1,32], index: 12, kind: input, shape index: {}]
  %s13 = inlined_call_operand.vmem [shape: f32[1,32], index: 13, kind: input, shape index: {}]
  %s14 = inlined_call_operand.hbm [shape: f32[16,32], index: 14, kind: output, shape index: {}]
  %s15 = sld [smem:[#allocation0]]
  $region66: #{roberta_forward.5} parent=0
    _
  %s17 = ssub.s32 1, %s15
  %s18 = scalar_select 0, %s17, %s15
  $region1: #{roberta_forward.5} parent=0
    #allocation2 [shape = 'u8[8192]{0}', space=vmem, size = 0x2000, scoped, tag = 'output window, operand 0, single buffered']
    #allocation3 [shape = 's32[1]{0}', space=sflag, size = 0x4, scoped, tag = 'scoped memory for roberta_forward.5']
    %19 = vsyncpa [#allocation3], 0
    // Predicated region
    $region2: #{roberta_forward.5} parent=1 // pred_check
      _
    $region3: #{roberta_forward.5} parent=1 // pred_check_branch
      %21 = sbr.rel (0) target = $region5
    $region4: #{roberta_forward.5} parent=1 // pred_region
      _
    $region5: #{roberta_forward.5} parent=1 // pred_fallthru
      _
    // Predicated region
    $region6: #{roberta_forward.5} parent=1 // pred_check
      _
    $region7: #{roberta_forward.5} parent=1 // pred_check_branch
      %23 = sbr.rel (0) target = $region9
    $region8: #{roberta_forward.5} parent=1 // pred_region
      _
    $region9: #{roberta_forward.5} parent=1 // pred_fallthru
      _
    // Predicated region
    $region10: #{roberta_forward.5} parent=1 // pred_check
      _
    $region11: #{roberta_forward.5} parent=1 // pred_check_branch
      %25 = sbr.rel (0) target = $region13
    $region12: #{roberta_forward.5} parent=1 // pred_region
      _
    $region13: #{roberta_forward.5} parent=1 // pred_fallthru
      _
    // Predicated region
    $region14: #{roberta_forward.5} parent=1 // pred_check
      _
    $region15: #{roberta_forward.5} parent=1 // pred_check_branch
      %27 = sbr.rel (0) target = $region17
    $region16: #{roberta_forward.5} parent=1 // pred_region
      _
    $region17: #{roberta_forward.5} parent=1 // pred_fallthru
      _
    // Predicated region
    $region18: #{roberta_forward.5} parent=1 // pred_check
      _
    $region19: #{roberta_forward.5} parent=1 // pred_check_branch
      %29 = sbr.rel (0) target = $region21
    $region20: #{roberta_forward.5} parent=1 // pred_region
      _
    $region21: #{roberta_forward.5} parent=1 // pred_fallthru
      _
    // Predicated region
    $region22: #{roberta_forward.5} parent=1 // pred_check
      _
    $region23: #{roberta_forward.5} parent=1 // pred_check_branch
      %31 = sbr.rel (0) target = $region25
    $region24: #{roberta_forward.5} parent=1 // pred_region
      _
    $region25: #{roberta_forward.5} parent=1 // pred_fallthru
      _
    // Predicated region
    $region26: #{roberta_forward.5} parent=1 // pred_check
      _
    $region27: #{roberta_forward.5} parent=1 // pred_check_branch
      %33 = sbr.rel (0) target = $region29
    $region28: #{roberta_forward.5} parent=1 // pred_region
      _
    $region29: #{roberta_forward.5} parent=1 // pred_fallthru
      _
    // Predicated region
    $region30: #{roberta_forward.5} parent=1 // pred_check
      _
    $region31: #{roberta_forward.5} parent=1 // pred_check_branch
      %35 = sbr.rel (0) target = $region33
    $region32: #{roberta_forward.5} parent=1 // pred_region
      _
    $region33: #{roberta_forward.5} parent=1 // pred_fallthru
      _
    // Predicated region
    $region34: #{roberta_forward.5} parent=1 // pred_check
      _
    $region35: #{roberta_forward.5} parent=1 // pred_check_branch
      %37 = sbr.rel (0) target = $region37
    $region36: #{roberta_forward.5} parent=1 // pred_region
      _
    $region37: #{roberta_forward.5} parent=1 // pred_fallthru
      _
    // Predicated region
    $region38: #{roberta_forward.5} parent=1 // pred_check
      _
    $region39: #{roberta_forward.5} parent=1 // pred_check_branch
      %39 = sbr.rel (0) target = $region41
    $region40: #{roberta_forward.5} parent=1 // pred_region
      _
    $region41: #{roberta_forward.5} parent=1 // pred_fallthru
      _
    // Predicated region
    $region42: #{roberta_forward.5} parent=1 // pred_check
      _
    $region43: #{roberta_forward.5} parent=1 // pred_check_branch
      %41 = sbr.rel (0) target = $region45
    $region44: #{roberta_forward.5} parent=1 // pred_region
      _
    $region45: #{roberta_forward.5} parent=1 // pred_fallthru
      _
    // Predicated region
    $region46: #{roberta_forward.5} parent=1 // pred_check
      _
    $region47: #{roberta_forward.5} parent=1 // pred_check_branch
      %43 = sbr.rel (0) target = $region49
    $region48: #{roberta_forward.5} parent=1 // pred_region
      _
    $region49: #{roberta_forward.5} parent=1 // pred_fallthru
      _
    // Predicated region
    $region50: #{roberta_forward.5} parent=1 // pred_check
      _
    $region51: #{roberta_forward.5} parent=1 // pred_check_branch
      %45 = sbr.rel (0) target = $region53
    $region52: #{roberta_forward.5} parent=1 // pred_region
      _
    $region53: #{roberta_forward.5} parent=1 // pred_fallthru
      _
    // Predicated region
    $region54: #{roberta_forward.5} parent=1 // pred_check
      _
    $region55: #{roberta_forward.5} parent=1 // pred_check_branch
      %47 = sbr.rel (0) target = $region57
    $region56: #{roberta_forward.5} parent=1 // pred_region
      _
    $region57: #{roberta_forward.5} parent=1 // pred_fallthru
      _
    %v49 = vld [vmem:[%s0] sm:$0xff]
    %v50 = vld [vmem:[%s0 + $0x8] sm:$0xff]
    %v51 = vpack.c.bf16 %v50, %v49
    %v52 = vld [vmem:[%s2] sm:$0xf]
    %v53 = vld [vmem:[%s2 + $0x4] sm:$0xf]
    %v54 = vld [vmem:[%s2 + $0x8] sm:$0xf]
    %v55 = vld [vmem:[%s2 + $0xc] sm:$0xf]
    %v56 = vld [vmem:[%s3] sm:$0x1]
    %v58 = vlaneseq
    %v59 = vshrl.u32 %v58, 7
    %v60 = vsub.s32 0, %v59
    %v61 = vrot.slane %v56, %v60
    %v67 = vunpack.c.l.b16 %v52
    %v68 = vunpack.c.l.b16 %v53
    %v69 = vunpack.c.l.b16 %v54
    %v70 = vunpack.c.l.b16 %v55
    %v71 = vpack.c.b16 %v68, %v67
    %v72 = vpack.c.b16 %v70, %v69
    %vm75 = vcmask 261120
    %v77 = vsel %vm75, %v51, 0
    %79 = vmatprep.subr.bf16.mxu0 0
    %80 = vmatpush1.bf16.msra.mxu0 0
    %81 = vmatprep.subr.bf16.mxu0 0
    %82 = vmatpush1.bf16.msra.mxu0 0
    %83 = vmatprep.subr.bf16.mxu0 0
    %84 = vmatpush1.bf16.msra.mxu0 0
    %85 = vmatprep.subr.bf16.mxu0 0
    %86 = vmatpush1.bf16.msra.mxu0 0
    %87 = vmatprep.subr.bf16.mxu0 0
    %88 = vmatpush1.bf16.msra.mxu0 0
    %89 = vmatprep.subr.bf16.mxu0 0
    %90 = vmatpush1.bf16.msra.mxu0 0
    %91 = vmatprep.subr.bf16.mxu0 0
    %92 = vmatpush1.bf16.msra.mxu0 %v72
    %93 = vmatprep.subr.bf16.mxu0 0
    %94 = vmatpush1.bf16.msra.mxu0 %v71
    %95 = vmatprep.subr.bf16.mxu0 0
    %96 = vmatpush2.bf16.msra.mxu0 0
    %97 = vmatprep.subr.bf16.mxu0 0
    %98 = vmatpush2.bf16.msra.mxu0 0
    %99 = vmatprep.subr.bf16.mxu0 0
    %100 = vmatpush2.bf16.msra.mxu0 0
    %101 = vmatprep.subr.bf16.mxu0 0
    %102 = vmatpush2.bf16.msra.mxu0 0
    %103 = vmatprep.subr.bf16.mxu0 0
    %104 = vmatpush2.bf16.msra.mxu0 0
    %105 = vmatprep.subr.bf16.mxu0 0
    %106 = vmatpush2.bf16.msra.mxu0 0
    %107 = vmatprep.subr.bf16.mxu0 0
    %108 = vmatpush2.bf16.msra.mxu0 0
    %109 = vmatprep.subr.bf16.mxu0 0
    %110 = vmatpush2.bf16.msra.mxu0 0
    %111 = vmatprep.mubr.bf16.mxu0 0
    %112 = vmatmul.mubr.bf16.gmra.mxu0 %v77
    %v113 = vpop.f32.mrf.mxu0
    %v114 = vadd.f32 %v61, %v113
    %v115 = vpop.f32.mrf.mxu0
    %v116 = vpop.f32.mrf.mxu0
    %v117 = vadd.f32 %v61, %v116
    %v118 = vpop.f32.mrf.mxu0
    %119 = vdwg.mxu0
    %v120 = vld [vmem:[%s1] sm:$0x3]
    %v121 = vpack.c.bf16 %v114, %v114
    %v122 = vpack.c.bf16 %v117, %v117
    %v125 = vunpack.c.l.s4 1966171168
    %v126 = vunpack.c.0.s8 %v125
    %v127 = vlaneseq
    %v128 = vshrl.u32 %v127, 7
    %v129 = vsub.s32 %v126, %v128
    %v130 = vrot.slane %v120, %v129
    %v131 = vcombine.high %v130, %v130
    %v133 = vunpack.c.l.s4 1966171168
    %v134 = vunpack.c.0.s8 %v133
    %v135 = vlaneseq
    %v136 = vshrl.u32 %v135, 7
    %v137 = vsub.s32 %v134, %v136
    %v138 = vrot.slane %v130, %v137
    %v140 = vunpack.c.l.s4 1966171168
    %v141 = vunpack.c.0.s8 %v140
    %v142 = vlaneseq
    %v143 = vshrl.u32 %v142, 7
    %v144 = vsub.s32 %v141, %v143
    %v145 = vrot.slane %v131, %v144
    %v146 = vlaneseq
    %v147 = vshrl.u32 %v146, 7
    %v148 = vsub.s32 0, %v147
    %v149 = vrot.slane %v138, %v148
    %v150 = vlaneseq
    %v151 = vshrl.u32 %v150, 7
    %v152 = vsub.s32 0, %v151
    %v153 = vrot.slane %v145, %v152
    %157 = vrot.lane.b32.xlu0 %v121, 96
    %v158 = vpop.permute.xlu0 %157
    %vm159 = vcmask 130048
    %v161 = vsel %vm159, %v121, 0
    %v164 = vsel %vm159, %v158, 0
    %166 = vmatprep.subr.bf16.mxu0 0
    %167 = vmatpush1.bf16.xpose.msra.mxu0 0
    %168 = vmatprep.subr.bf16.mxu0 0
    %169 = vmatpush1.bf16.xpose.msra.mxu0 0
    %170 = vmatprep.subr.bf16.mxu0 0
    %171 = vmatpush1.bf16.xpose.msra.mxu0 0
    %172 = vmatprep.subr.bf16.mxu0 0
    %173 = vmatpush1.bf16.xpose.msra.mxu0 0
    %174 = vmatprep.subr.bf16.mxu0 0
    %175 = vmatpush1.bf16.xpose.msra.mxu0 0
    %176 = vmatprep.subr.bf16.mxu0 0
    %177 = vmatpush1.bf16.xpose.msra.mxu0 0
    %178 = vmatprep.subr.bf16.mxu0 0
    %179 = vmatpush1.bf16.xpose.msra.mxu0 0
    %180 = vmatprep.subr.bf16.mxu0 0
    %181 = vmatpush1.bf16.xpose.msra.mxu0 %v164
    %182 = vmatprep.subr.bf16.mxu0 0
    %183 = vmatpush2.bf16.xpose.msra.mxu0 0
    %184 = vmatprep.subr.bf16.mxu0 0
    %185 = vmatpush2.bf16.xpose.msra.mxu0 0
    %186 = vmatprep.subr.bf16.mxu0 0
    %187 = vmatpush2.bf16.xpose.msra.mxu0 0
    %188 = vmatprep.subr.bf16.mxu0 0
    %189 = vmatpush2.bf16.xpose.msra.mxu0 0
    %190 = vmatprep.subr.bf16.mxu0 0
    %191 = vmatpush2.bf16.xpose.msra.mxu0 0
    %192 = vmatprep.subr.bf16.mxu0 0
    %193 = vmatpush2.bf16.xpose.msra.mxu0 0
    %194 = vmatprep.subr.bf16.mxu0 0
    %195 = vmatpush2.bf16.xpose.msra.mxu0 0
    %196 = vmatprep.subr.bf16.mxu0 0
    %197 = vmatpush2.bf16.xpose.msra.mxu0 0
    %198 = vmatprep.mubr.bf16.mxu0 0
    %199 = vmatmul.mubr.bf16.gmra.mxu0 %v161
    %v200 = vpop.f32.mrf.mxu0
    %v201 = vadd.f32 %v149, %v200
    %v202 = vpop.f32.mrf.mxu0
    %v203 = vpop.f32.mrf.mxu0
    %v204 = vpop.f32.mrf.mxu0
    %205 = vdwg.mxu0
    %207 = vrot.lane.b32.xlu0 %v122, 96
    %v208 = vpop.permute.xlu0 %207
    %v210 = vsel %vm159, %v122, 0
    %v213 = vsel %vm159, %v208, 0
    %215 = vmatprep.subr.bf16.mxu0 0
    %216 = vmatpush1.bf16.xpose.msra.mxu0 0
    %217 = vmatprep.subr.bf16.mxu0 0
    %218 = vmatpush1.bf16.xpose.msra.mxu0 0
    %219 = vmatprep.subr.bf16.mxu0 0
    %220 = vmatpush1.bf16.xpose.msra.mxu0 0
    %221 = vmatprep.subr.bf16.mxu0 0
    %222 = vmatpush1.bf16.xpose.msra.mxu0 0
    %223 = vmatprep.subr.bf16.mxu0 0
    %224 = vmatpush1.bf16.xpose.msra.mxu0 0
    %225 = vmatprep.subr.bf16.mxu0 0
    %226 = vmatpush1.bf16.xpose.msra.mxu0 0
    %227 = vmatprep.subr.bf16.mxu0 0
    %228 = vmatpush1.bf16.xpose.msra.mxu0 0
    %229 = vmatprep.subr.bf16.mxu0 0
    %230 = vmatpush1.bf16.xpose.msra.mxu0 %v213
    %231 = vmatprep.subr.bf16.mxu0 0
    %232 = vmatpush2.bf16.xpose.msra.mxu0 0
    %233 = vmatprep.subr.bf16.mxu0 0
    %234 = vmatpush2.bf16.xpose.msra.mxu0 0
    %235 = vmatprep.subr.bf16.mxu0 0
    %236 = vmatpush2.bf16.xpose.msra.mxu0 0
    %237 = vmatprep.subr.bf16.mxu0 0
    %238 = vmatpush2.bf16.xpose.msra.mxu0 0
    %239 = vmatprep.subr.bf16.mxu0 0
    %240 = vmatpush2.bf16.xpose.msra.mxu0 0
    %241 = vmatprep.subr.bf16.mxu0 0
    %242 = vmatpush2.bf16.xpose.msra.mxu0 0
    %243 = vmatprep.subr.bf16.mxu0 0
    %244 = vmatpush2.bf16.xpose.msra.mxu0 0
    %245 = vmatprep.subr.bf16.mxu0 0
    %246 = vmatpush2.bf16.xpose.msra.mxu0 0
    %247 = vmatprep.mubr.bf16.mxu0 0
    %248 = vmatmul.mubr.bf16.gmra.mxu0 %v210
    %v249 = vpop.f32.mrf.mxu0
    %v250 = vadd.f32 %v153, %v249
    %v251 = vpop.f32.mrf.mxu0
    %v252 = vpop.f32.mrf.mxu0
    %v253 = vpop.f32.mrf.mxu0
    %254 = vdwg.mxu0
    %vm255 = vcmask 64512
    %v256 = vsel %vm255, %v201, -inf
    %257 = vmax.xlane.f32.xlu0 %v256
    %v258 = vpop.xlane.xlu0 %257
    %v259 = vsel %vm255, %v250, -inf
    %260 = vmax.xlane.f32.xlu0 %v259
    %v261 = vpop.xlane.xlu0 %260
    %v262 = vsub.f32 %v201, %v258
    %v263 = vsub.f32 %v250, %v261
    %v264 = vmul.f32 %v262, 1.442695
    %v265 = vpow.pop %v264
    %v266 = vmul.f32 %v263, 1.442695
    %v267 = vpow.pop %v266
    %v268 = vsel %vm255, %v265, 0.0
    %269 = vadd.xlane.f32.xlu0 %v268
    %v270 = vpop.xlane.xlu0 %269
    %v271 = vsel %vm255, %v267, 0.0
    %272 = vadd.xlane.f32.xlu0 %v271
    %v273 = vpop.xlane.xlu0 %272
    %v274 = vrcp.pop %v270
    %v275 = vrcp.pop %v273
    %v276 = vmul.f32 %v265, %v274
    %v277 = vmul.f32 %v267, %v275
    %v278 = vpack.c.bf16 %v276, %v276
    %v279 = vpack.c.bf16 %v277, %v277
    %280 = vrot.lane.b32.xlu0 %v121, 64
    %v281 = vpop.permute.xlu0 %280
    %v283 = vsel %vm255, %v278, 0
    %vm285 = vcmask 1043456
    %v287 = vsel %vm285, %v281, 0
    %289 = vmatprep.subr.bf16.mxu0 0
    %290 = vmatpush1.bf16.msra.mxu0 0
    %291 = vmatprep.subr.bf16.mxu0 0
    %292 = vmatpush1.bf16.msra.mxu0 0
    %293 = vmatprep.subr.bf16.mxu0 0
    %294 = vmatpush1.bf16.msra.mxu0 0
    %295 = vmatprep.subr.bf16.mxu0 0
    %296 = vmatpush1.bf16.msra.mxu0 0
    %297 = vmatprep.subr.bf16.mxu0 0
    %298 = vmatpush1.bf16.msra.mxu0 0
    %299 = vmatprep.subr.bf16.mxu0 0
    %300 = vmatpush1.bf16.msra.mxu0 0
    %301 = vmatprep.subr.bf16.mxu0 0
    %302 = vmatpush1.bf16.msra.mxu0 0
    %303 = vmatprep.subr.bf16.mxu0 0
    %304 = vmatpush1.bf16.msra.mxu0 %v287
    %305 = vmatprep.subr.bf16.mxu0 0
    %306 = vmatpush2.bf16.msra.mxu0 0
    %307 = vmatprep.subr.bf16.mxu0 0
    %308 = vmatpush2.bf16.msra.mxu0 0
    %309 = vmatprep.subr.bf16.mxu0 0
    %310 = vmatpush2.bf16.msra.mxu0 0
    %311 = vmatprep.subr.bf16.mxu0 0
    %312 = vmatpush2.bf16.msra.mxu0 0
    %313 = vmatprep.subr.bf16.mxu0 0
    %314 = vmatpush2.bf16.msra.mxu0 0
    %315 = vmatprep.subr.bf16.mxu0 0
    %316 = vmatpush2.bf16.msra.mxu0 0
    %317 = vmatprep.subr.bf16.mxu0 0
    %318 = vmatpush2.bf16.msra.mxu0 0
    %319 = vmatprep.subr.bf16.mxu0 0
    %320 = vmatpush2.bf16.msra.mxu0 0
    %321 = vmatprep.mubr.bf16.mxu0 0
    %322 = vmatmul.mubr.bf16.gmra.mxu0 %v283
    %v323 = vpop.f32.mrf.mxu0
    %v324 = vadd.f32 0.0, %v323
    %v325 = vpop.f32.mrf.mxu0
    %v326 = vpop.f32.mrf.mxu0
    %v327 = vpop.f32.mrf.mxu0
    %328 = vdwg.mxu0
    %329 = vrot.lane.b32.xlu0 %v122, 64
    %v330 = vpop.permute.xlu0 %329
    %v332 = vsel %vm255, %v279, 0
    %v335 = vsel %vm285, %v330, 0
    %337 = vmatprep.subr.bf16.mxu0 0
    %338 = vmatpush1.bf16.msra.mxu0 0
    %339 = vmatprep.subr.bf16.mxu0 0
    %340 = vmatpush1.bf16.msra.mxu0 0
    %341 = vmatprep.subr.bf16.mxu0 0
    %342 = vmatpush1.bf16.msra.mxu0 0
    %343 = vmatprep.subr.bf16.mxu0 0
    %344 = vmatpush1.bf16.msra.mxu0 0
    %345 = vmatprep.subr.bf16.mxu0 0
    %346 = vmatpush1.bf16.msra.mxu0 0
    %347 = vmatprep.subr.bf16.mxu0 0
    %348 = vmatpush1.bf16.msra.mxu0 0
    %349 = vmatprep.subr.bf16.mxu0 0
    %350 = vmatpush1.bf16.msra.mxu0 0
    %351 = vmatprep.subr.bf16.mxu0 0
    %352 = vmatpush1.bf16.msra.mxu0 %v335
    %353 = vmatprep.subr.bf16.mxu0 0
    %354 = vmatpush2.bf16.msra.mxu0 0
    %355 = vmatprep.subr.bf16.mxu0 0
    %356 = vmatpush2.bf16.msra.mxu0 0
    %357 = vmatprep.subr.bf16.mxu0 0
    %358 = vmatpush2.bf16.msra.mxu0 0
    %359 = vmatprep.subr.bf16.mxu0 0
    %360 = vmatpush2.bf16.msra.mxu0 0
    %361 = vmatprep.subr.bf16.mxu0 0
    %362 = vmatpush2.bf16.msra.mxu0 0
    %363 = vmatprep.subr.bf16.mxu0 0
    %364 = vmatpush2.bf16.msra.mxu0 0
    %365 = vmatprep.subr.bf16.mxu0 0
    %366 = vmatpush2.bf16.msra.mxu0 0
    %367 = vmatprep.subr.bf16.mxu0 0
    %368 = vmatpush2.bf16.msra.mxu0 0
    %369 = vmatprep.mubr.bf16.mxu0 0
    %370 = vmatmul.mubr.bf16.gmra.mxu0 %v332
    %v371 = vpop.f32.mrf.mxu0
    %v372 = vadd.f32 0.0, %v371
    %v373 = vpop.f32.mrf.mxu0
    %v374 = vpop.f32.mrf.mxu0
    %v375 = vpop.f32.mrf.mxu0
    %376 = vdwg.mxu0
    %v377 = vpack.c.bf16 %v372, %v324
    %v378 = vld [vmem:[%s4] sm:$0xf]
    %v379 = vld [vmem:[%s4 + $0x4] sm:$0xf]
    %380 = vrot.lane.b32.xlu0 %v121, 112
    %v381 = vpop.permute.xlu0 %380
    %382 = vrot.lane.b32.xlu0 %v121, 80
    %v383 = vpop.permute.xlu0 %382
    %v385 = vsel %vm159, %v381, 0
    %v388 = vsel %vm159, %v383, 0
    %390 = vmatprep.subr.bf16.mxu0 0
    %391 = vmatpush1.bf16.xpose.msra.mxu0 0
    %392 = vmatprep.subr.bf16.mxu0 0
    %393 = vmatpush1.bf16.xpose.msra.mxu0 0
    %394 = vmatprep.subr.bf16.mxu0 0
    %395 = vmatpush1.bf16.xpose.msra.mxu0 0
    %396 = vmatprep.subr.bf16.mxu0 0
    %397 = vmatpush1.bf16.xpose.msra.mxu0 0
    %398 = vmatprep.subr.bf16.mxu0 0
    %399 = vmatpush1.bf16.xpose.msra.mxu0 0
    %400 = vmatprep.subr.bf16.mxu0 0
    %401 = vmatpush1.bf16.xpose.msra.mxu0 0
    %402 = vmatprep.subr.bf16.mxu0 0
    %403 = vmatpush1.bf16.xpose.msra.mxu0 0
    %404 = vmatprep.subr.bf16.mxu0 0
    %405 = vmatpush1.bf16.xpose.msra.mxu0 %v388
    %406 = vmatprep.subr.bf16.mxu0 0
    %407 = vmatpush2.bf16.xpose.msra.mxu0 0
    %408 = vmatprep.subr.bf16.mxu0 0
    %409 = vmatpush2.bf16.xpose.msra.mxu0 0
    %410 = vmatprep.subr.bf16.mxu0 0
    %411 = vmatpush2.bf16.xpose.msra.mxu0 0
    %412 = vmatprep.subr.bf16.mxu0 0
    %413 = vmatpush2.bf16.xpose.msra.mxu0 0
    %414 = vmatprep.subr.bf16.mxu0 0
    %415 = vmatpush2.bf16.xpose.msra.mxu0 0
    %416 = vmatprep.subr.bf16.mxu0 0
    %417 = vmatpush2.bf16.xpose.msra.mxu0 0
    %418 = vmatprep.subr.bf16.mxu0 0
    %419 = vmatpush2.bf16.xpose.msra.mxu0 0
    %420 = vmatprep.subr.bf16.mxu0 0
    %421 = vmatpush2.bf16.xpose.msra.mxu0 0
    %422 = vmatprep.mubr.bf16.mxu0 0
    %423 = vmatmul.mubr.bf16.gmra.mxu0 %v385
    %v424 = vpop.f32.mrf.mxu0
    %v425 = vadd.f32 %v149, %v424
    %v426 = vpop.f32.mrf.mxu0
    %v427 = vpop.f32.mrf.mxu0
    %v428 = vpop.f32.mrf.mxu0
    %429 = vdwg.mxu0
    %430 = vrot.lane.b32.xlu0 %v122, 112
    %v431 = vpop.permute.xlu0 %430
    %432 = vrot.lane.b32.xlu0 %v122, 80
    %v433 = vpop.permute.xlu0 %432
    %v435 = vsel %vm159, %v431, 0
    %v438 = vsel %vm159, %v433, 0
    %440 = vmatprep.subr.bf16.mxu0 0
    %441 = vmatpush1.bf16.xpose.msra.mxu0 0
    %442 = vmatprep.subr.bf16.mxu0 0
    %443 = vmatpush1.bf16.xpose.msra.mxu0 0
    %444 = vmatprep.subr.bf16.mxu0 0
    %445 = vmatpush1.bf16.xpose.msra.mxu0 0
    %446 = vmatprep.subr.bf16.mxu0 0
    %447 = vmatpush1.bf16.xpose.msra.mxu0 0
    %448 = vmatprep.subr.bf16.mxu0 0
    %449 = vmatpush1.bf16.xpose.msra.mxu0 0
    %450 = vmatprep.subr.bf16.mxu0 0
    %451 = vmatpush1.bf16.xpose.msra.mxu0 0
    %452 = vmatprep.subr.bf16.mxu0 0
    %453 = vmatpush1.bf16.xpose.msra.mxu0 0
    %454 = vmatprep.subr.bf16.mxu0 0
    %455 = vmatpush1.bf16.xpose.msra.mxu0 %v438
    %456 = vmatprep.subr.bf16.mxu0 0
    %457 = vmatpush2.bf16.xpose.msra.mxu0 0
    %458 = vmatprep.subr.bf16.mxu0 0
    %459 = vmatpush2.bf16.xpose.msra.mxu0 0
    %460 = vmatprep.subr.bf16.mxu0 0
    %461 = vmatpush2.bf16.xpose.msra.mxu0 0
    %462 = vmatprep.subr.bf16.mxu0 0
    %463 = vmatpush2.bf16.xpose.msra.mxu0 0
    %464 = vmatprep.subr.bf16.mxu0 0
    %465 = vmatpush2.bf16.xpose.msra.mxu0 0
    %466 = vmatprep.subr.bf16.mxu0 0
    %467 = vmatpush2.bf16.xpose.msra.mxu0 0
    %468 = vmatprep.subr.bf16.mxu0 0
    %469 = vmatpush2.bf16.xpose.msra.mxu0 0
    %470 = vmatprep.subr.bf16.mxu0 0
    %471 = vmatpush2.bf16.xpose.msra.mxu0 0
    %472 = vmatprep.mubr.bf16.mxu0 0
    %473 = vmatmul.mubr.bf16.gmra.mxu0 %v435
    %v474 = vpop.f32.mrf.mxu0
    %v475 = vadd.f32 %v153, %v474
    %v476 = vpop.f32.mrf.mxu0
    %v477 = vpop.f32.mrf.mxu0
    %v478 = vpop.f32.mrf.mxu0
    %479 = vdwg.mxu0
    %v480 = vsel %vm255, %v425, -inf
    %481 = vmax.xlane.f32.xlu0 %v480
    %v482 = vpop.xlane.xlu0 %481
    %v483 = vsel %vm255, %v475, -inf
    %484 = vmax.xlane.f32.xlu0 %v483
    %v485 = vpop.xlane.xlu0 %484
    %v486 = vsub.f32 %v425, %v482
    %v487 = vsub.f32 %v475, %v485
    %v488 = vmul.f32 %v486, 1.442695
    %v489 = vpow.pop %v488
    %v490 = vmul.f32 %v487, 1.442695
    %v491 = vpow.pop %v490
    %v492 = vsel %vm255, %v489, 0.0
    %493 = vadd.xlane.f32.xlu0 %v492
    %v494 = vpop.xlane.xlu0 %493
    %v495 = vsel %vm255, %v491, 0.0
    %496 = vadd.xlane.f32.xlu0 %v495
    %v497 = vpop.xlane.xlu0 %496
    %v498 = vrcp.pop %v494
    %v499 = vrcp.pop %v497
    %v500 = vmul.f32 %v489, %v498
    %v501 = vmul.f32 %v491, %v499
    %v502 = vpack.c.bf16 %v500, %v500
    %v503 = vpack.c.bf16 %v501, %v501
    %504 = vrot.lane.b32.xlu0 %v121, 48
    %v505 = vpop.permute.xlu0 %504
    %v507 = vsel %vm255, %v502, 0
    %v510 = vsel %vm285, %v505, 0
    %512 = vmatprep.subr.bf16.mxu0 0
    %513 = vmatpush1.bf16.msra.mxu0 0
    %514 = vmatprep.subr.bf16.mxu0 0
    %515 = vmatpush1.bf16.msra.mxu0 0
    %516 = vmatprep.subr.bf16.mxu0 0
    %517 = vmatpush1.bf16.msra.mxu0 0
    %518 = vmatprep.subr.bf16.mxu0 0
    %519 = vmatpush1.bf16.msra.mxu0 0
    %520 = vmatprep.subr.bf16.mxu0 0
    %521 = vmatpush1.bf16.msra.mxu0 0
    %522 = vmatprep.subr.bf16.mxu0 0
    %523 = vmatpush1.bf16.msra.mxu0 0
    %524 = vmatprep.subr.bf16.mxu0 0
    %525 = vmatpush1.bf16.msra.mxu0 0
    %526 = vmatprep.subr.bf16.mxu0 0
    %527 = vmatpush1.bf16.msra.mxu0 %v510
    %528 = vmatprep.subr.bf16.mxu0 0
    %529 = vmatpush2.bf16.msra.mxu0 0
    %530 = vmatprep.subr.bf16.mxu0 0
    %531 = vmatpush2.bf16.msra.mxu0 0
    %532 = vmatprep.subr.bf16.mxu0 0
    %533 = vmatpush2.bf16.msra.mxu0 0
    %534 = vmatprep.subr.bf16.mxu0 0
    %535 = vmatpush2.bf16.msra.mxu0 0
    %536 = vmatprep.subr.bf16.mxu0 0
    %537 = vmatpush2.bf16.msra.mxu0 0
    %538 = vmatprep.subr.bf16.mxu0 0
    %539 = vmatpush2.bf16.msra.mxu0 0
    %540 = vmatprep.subr.bf16.mxu0 0
    %541 = vmatpush2.bf16.msra.mxu0 0
    %542 = vmatprep.subr.bf16.mxu0 0
    %543 = vmatpush2.bf16.msra.mxu0 0
    %544 = vmatprep.mubr.bf16.mxu0 0
    %545 = vmatmul.mubr.bf16.gmra.mxu0 %v507
    %v546 = vpop.f32.mrf.mxu0
    %v547 = vadd.f32 0.0, %v546
    %v548 = vpop.f32.mrf.mxu0
    %v549 = vpop.f32.mrf.mxu0
    %v550 = vpop.f32.mrf.mxu0
    %551 = vdwg.mxu0
    %552 = vrot.lane.b32.xlu0 %v122, 48
    %v553 = vpop.permute.xlu0 %552
    %v555 = vsel %vm255, %v503, 0
    %v558 = vsel %vm285, %v553, 0
    %560 = vmatprep.subr.bf16.mxu0 0
    %561 = vmatpush1.bf16.msra.mxu0 0
    %562 = vmatprep.subr.bf16.mxu0 0
    %563 = vmatpush1.bf16.msra.mxu0 0
    %564 = vmatprep.subr.bf16.mxu0 0
    %565 = vmatpush1.bf16.msra.mxu0 0
    %566 = vmatprep.subr.bf16.mxu0 0
    %567 = vmatpush1.bf16.msra.mxu0 0
    %568 = vmatprep.subr.bf16.mxu0 0
    %569 = vmatpush1.bf16.msra.mxu0 0
    %570 = vmatprep.subr.bf16.mxu0 0
    %571 = vmatpush1.bf16.msra.mxu0 0
    %572 = vmatprep.subr.bf16.mxu0 0
    %573 = vmatpush1.bf16.msra.mxu0 0
    %574 = vmatprep.subr.bf16.mxu0 0
    %575 = vmatpush1.bf16.msra.mxu0 %v558
    %576 = vmatprep.subr.bf16.mxu0 0
    %577 = vmatpush2.bf16.msra.mxu0 0
    %578 = vmatprep.subr.bf16.mxu0 0
    %579 = vmatpush2.bf16.msra.mxu0 0
    %580 = vmatprep.subr.bf16.mxu0 0
    %581 = vmatpush2.bf16.msra.mxu0 0
    %582 = vmatprep.subr.bf16.mxu0 0
    %583 = vmatpush2.bf16.msra.mxu0 0
    %584 = vmatprep.subr.bf16.mxu0 0
    %585 = vmatpush2.bf16.msra.mxu0 0
    %586 = vmatprep.subr.bf16.mxu0 0
    %587 = vmatpush2.bf16.msra.mxu0 0
    %588 = vmatprep.subr.bf16.mxu0 0
    %589 = vmatpush2.bf16.msra.mxu0 0
    %590 = vmatprep.subr.bf16.mxu0 0
    %591 = vmatpush2.bf16.msra.mxu0 0
    %592 = vmatprep.mubr.bf16.mxu0 0
    %593 = vmatmul.mubr.bf16.gmra.mxu0 %v555
    %v594 = vpop.f32.mrf.mxu0
    %v595 = vadd.f32 0.0, %v594
    %v596 = vpop.f32.mrf.mxu0
    %v597 = vpop.f32.mrf.mxu0
    %v598 = vpop.f32.mrf.mxu0
    %599 = vdwg.mxu0
    %v600 = vpack.c.bf16 %v595, %v547
    %s601 = scalar_lea.vmem %s4, 8
    %v602 = vld [vmem:[%s601] sm:$0xf]
    %v603 = vld [vmem:[%s601 + $0x4] sm:$0xf]
    %v606 = vunpack.c.l.b16 %v602
    %v607 = vunpack.c.l.b16 %v603
    %v608 = vpack.c.b16 %v607, %v606
    %v611 = vsel %vm159, %v600, 0
    %613 = vmatprep.subr.bf16.mxu0 0
    %614 = vmatpush1.bf16.msra.mxu0 0
    %615 = vmatprep.subr.bf16.mxu0 0
    %616 = vmatpush1.bf16.msra.mxu0 0
    %617 = vmatprep.subr.bf16.mxu0 0
    %618 = vmatpush1.bf16.msra.mxu0 0
    %619 = vmatprep.subr.bf16.mxu0 0
    %620 = vmatpush1.bf16.msra.mxu0 0
    %621 = vmatprep.subr.bf16.mxu0 0
    %622 = vmatpush1.bf16.msra.mxu0 0
    %623 = vmatprep.subr.bf16.mxu0 0
    %624 = vmatpush1.bf16.msra.mxu0 0
    %625 = vmatprep.subr.bf16.mxu0 0
    %626 = vmatpush1.bf16.msra.mxu0 0
    %627 = vmatprep.subr.bf16.mxu0 0
    %628 = vmatpush1.bf16.msra.mxu0 %v608
    %629 = vmatprep.subr.bf16.mxu0 0
    %630 = vmatpush2.bf16.msra.mxu0 0
    %631 = vmatprep.subr.bf16.mxu0 0
    %632 = vmatpush2.bf16.msra.mxu0 0
    %633 = vmatprep.subr.bf16.mxu0 0
    %634 = vmatpush2.bf16.msra.mxu0 0
    %635 = vmatprep.subr.bf16.mxu0 0
    %636 = vmatpush2.bf16.msra.mxu0 0
    %637 = vmatprep.subr.bf16.mxu0 0
    %638 = vmatpush2.bf16.msra.mxu0 0
    %639 = vmatprep.subr.bf16.mxu0 0
    %640 = vmatpush2.bf16.msra.mxu0 0
    %641 = vmatprep.subr.bf16.mxu0 0
    %642 = vmatpush2.bf16.msra.mxu0 0
    %643 = vmatprep.subr.bf16.mxu0 0
    %644 = vmatpush2.bf16.msra.mxu0 0
    %645 = vmatprep.mubr.bf16.mxu0 0
    %646 = vmatmul.mubr.bf16.gmra.mxu0 %v611
    %v647 = vpop.f32.mrf.mxu0
    %v648 = vadd.f32 0.0, %v647
    %v649 = vpop.f32.mrf.mxu0
    %v650 = vpop.f32.mrf.mxu0
    %v651 = vadd.f32 0.0, %v650
    %v652 = vpop.f32.mrf.mxu0
    %653 = vdwg.mxu0
    %v656 = vunpack.c.l.b16 %v378
    %v657 = vunpack.c.l.b16 %v379
    %v658 = vpack.c.b16 %v657, %v656
    %v661 = vsel %vm159, %v377, 0
    %663 = vmatprep.subr.bf16.mxu0 0
    %664 = vmatpush1.bf16.msra.mxu0 0
    %665 = vmatprep.subr.bf16.mxu0 0
    %666 = vmatpush1.bf16.msra.mxu0 0
    %667 = vmatprep.subr.bf16.mxu0 0
    %668 = vmatpush1.bf16.msra.mxu0 0
    %669 = vmatprep.subr.bf16.mxu0 0
    %670 = vmatpush1.bf16.msra.mxu0 0
    %671 = vmatprep.subr.bf16.mxu0 0
    %672 = vmatpush1.bf16.msra.mxu0 0
    %673 = vmatprep.subr.bf16.mxu0 0
    %674 = vmatpush1.bf16.msra.mxu0 0
    %675 = vmatprep.subr.bf16.mxu0 0
    %676 = vmatpush1.bf16.msra.mxu0 0
    %677 = vmatprep.subr.bf16.mxu0 0
    %678 = vmatpush1.bf16.msra.mxu0 %v658
    %679 = vmatprep.subr.bf16.mxu0 0
    %680 = vmatpush2.bf16.msra.mxu0 0
    %681 = vmatprep.subr.bf16.mxu0 0
    %682 = vmatpush2.bf16.msra.mxu0 0
    %683 = vmatprep.subr.bf16.mxu0 0
    %684 = vmatpush2.bf16.msra.mxu0 0
    %685 = vmatprep.subr.bf16.mxu0 0
    %686 = vmatpush2.bf16.msra.mxu0 0
    %687 = vmatprep.subr.bf16.mxu0 0
    %688 = vmatpush2.bf16.msra.mxu0 0
    %689 = vmatprep.subr.bf16.mxu0 0
    %690 = vmatpush2.bf16.msra.mxu0 0
    %691 = vmatprep.subr.bf16.mxu0 0
    %692 = vmatpush2.bf16.msra.mxu0 0
    %693 = vmatprep.subr.bf16.mxu0 0
    %694 = vmatpush2.bf16.msra.mxu0 0
    %695 = vmatprep.mubr.bf16.mxu0 0
    %696 = vmatmul.mubr.bf16.gmra.mxu0 %v661
    %v697 = vpop.f32.mrf.mxu0
    %v698 = vadd.f32 %v648, %v697
    %v699 = vpop.f32.mrf.mxu0
    %v700 = vpop.f32.mrf.mxu0
    %v701 = vadd.f32 %v651, %v700
    %v702 = vpop.f32.mrf.mxu0
    %703 = vdwg.mxu0
    %v704 = vld [vmem:[%s5] sm:$0x1]
    %v706 = vlaneseq
    %v707 = vshrl.u32 %v706, 7
    %v708 = vsub.s32 0, %v707
    %v709 = vrot.slane %v704, %v708
    %v711 = vadd.f32 %v698, %v709
    %v712 = vadd.f32 %v701, %v709
    %v713 = vadd.f32 %v711, %v49
    %v714 = vadd.f32 %v712, %v50
    %v715 = vld [vmem:[%s6] sm:$0x1]
    %v716 = vld [vmem:[%s7] sm:$0x1]
    %v717 = vsel %vm75, %v713, 0.0
    %718 = vadd.xlane.f32.xlu0 %v717
    %v719 = vpop.xlane.xlu0 %718
    %v720 = vsel %vm75, %v714, 0.0
    %721 = vadd.xlane.f32.xlu0 %v720
    %v722 = vpop.xlane.xlu0 %721
    %v723 = vrcp.pop 32.0
    %v724 = vmul.f32 %v719, %v723
    %v725 = vmul.f32 %v722, %v723
    %v726 = vsub.f32 %v713, %v724
    %v727 = vsub.f32 %v714, %v725
    %v728 = vmul.f32 %v726, %v726
    %v729 = vmul.f32 %v727, %v727
    %v730 = vsel %vm75, %v728, 0.0
    %731 = vadd.xlane.f32.xlu0 %v730
    %v732 = vpop.xlane.xlu0 %731
    %v733 = vsel %vm75, %v729, 0.0
    %734 = vadd.xlane.f32.xlu0 %v733
    %v735 = vpop.xlane.xlu0 %734
    %v736 = vmul.f32 %v732, %v723
    %v737 = vmul.f32 %v735, %v723
    %v738 = vadd.f32 %v736, 1e-05
    %v739 = vadd.f32 %v737, 1e-05
    %v740 = vrsqrt.pop %v738
    %v741 = vrsqrt.pop %v739
    %v742 = vmul.f32 %v726, %v740
    %v743 = vmul.f32 %v727, %v741
    %v745 = vlaneseq
    %v746 = vshrl.u32 %v745, 7
    %v747 = vsub.s32 0, %v746
    %v748 = vrot.slane %v715, %v747
    %v750 = vmul.f32 %v742, %v748
    %v751 = vmul.f32 %v743, %v748
    %v753 = vlaneseq
    %v754 = vshrl.u32 %v753, 7
    %v755 = vsub.s32 0, %v754
    %v756 = vrot.slane %v716, %v755
    %v758 = vadd.f32 %v750, %v756
    %v759 = vadd.f32 %v751, %v756
    %v760 = vpack.c.bf16 %v759, %v758
    %v761 = vld [vmem:[%s8] sm:$0xf]
    %v762 = vld [vmem:[%s8 + $0x4] sm:$0xf]
    %v763 = vld [vmem:[%s8 + $0x8] sm:$0xf]
    %v764 = vld [vmem:[%s8 + $0xc] sm:$0xf]
    %v765 = vld [vmem:[%s9] sm:$0x1]
    %v767 = vlaneseq
    %v768 = vshrl.u32 %v767, 7
    %v769 = vsub.s32 0, %v768
    %v770 = vrot.slane %v765, %v769
    %v776 = vunpack.c.l.b16 %v761
    %v777 = vunpack.c.l.b16 %v762
    %v778 = vunpack.c.l.b16 %v763
    %v779 = vunpack.c.l.b16 %v764
    %v780 = vpack.c.b16 %v777, %v776
    %v781 = vpack.c.b16 %v779, %v778
    %v785 = vsel %vm75, %v760, 0
    %787 = vmatprep.subr.bf16.mxu0 0
    %788 = vmatpush1.bf16.msra.mxu0 0
    %789 = vmatprep.subr.bf16.mxu0 0
    %790 = vmatpush1.bf16.msra.mxu0 0
    %791 = vmatprep.subr.bf16.mxu0 0
    %792 = vmatpush1.bf16.msra.mxu0 0
    %793 = vmatprep.subr.bf16.mxu0 0
    %794 = vmatpush1.bf16.msra.mxu0 0
    %795 = vmatprep.subr.bf16.mxu0 0
    %796 = vmatpush1.bf16.msra.mxu0 0
    %797 = vmatprep.subr.bf16.mxu0 0
    %798 = vmatpush1.bf16.msra.mxu0 0
    %799 = vmatprep.subr.bf16.mxu0 0
    %800 = vmatpush1.bf16.msra.mxu0 %v781
    %801 = vmatprep.subr.bf16.mxu0 0
    %802 = vmatpush1.bf16.msra.mxu0 %v780
    %803 = vmatprep.subr.bf16.mxu0 0
    %804 = vmatpush2.bf16.msra.mxu0 0
    %805 = vmatprep.subr.bf16.mxu0 0
    %806 = vmatpush2.bf16.msra.mxu0 0
    %807 = vmatprep.subr.bf16.mxu0 0
    %808 = vmatpush2.bf16.msra.mxu0 0
    %809 = vmatprep.subr.bf16.mxu0 0
    %810 = vmatpush2.bf16.msra.mxu0 0
    %811 = vmatprep.subr.bf16.mxu0 0
    %812 = vmatpush2.bf16.msra.mxu0 0
    %813 = vmatprep.subr.bf16.mxu0 0
    %814 = vmatpush2.bf16.msra.mxu0 0
    %815 = vmatprep.subr.bf16.mxu0 0
    %816 = vmatpush2.bf16.msra.mxu0 0
    %817 = vmatprep.subr.bf16.mxu0 0
    %818 = vmatpush2.bf16.msra.mxu0 0
    %819 = vmatprep.mubr.bf16.mxu0 0
    %820 = vmatmul.mubr.bf16.gmra.mxu0 %v785
    %v821 = vpop.f32.mrf.mxu0
    %v822 = vadd.f32 %v770, %v821
    %v823 = vpop.f32.mrf.mxu0
    %v824 = vpop.f32.mrf.mxu0
    %v825 = vadd.f32 %v770, %v824
    %v826 = vpop.f32.mrf.mxu0
    %827 = vdwg.mxu0
    %v828 = vmul.f32 %v822, %v822
    %v829 = vmul.f32 %v825, %v825
    %v830 = vmul.f32 %v822, %v828
    %v831 = vmul.f32 %v825, %v829
    %v832 = vmul.f32 %v830, 0.044715
    %v833 = vmul.f32 %v831, 0.044715
    %v834 = vadd.f32 %v822, %v832
    %v835 = vadd.f32 %v825, %v833
    %v836 = vmul.f32 %v834, 0.7978846
    %v837 = vmul.f32 %v835, 0.7978846
    %v838 = vtanh.pop %v836
    %v839 = vtanh.pop %v837
    %v840 = vadd.f32 %v838, 1.0
    %v841 = vadd.f32 %v839, 1.0
    %v842 = vmul.f32 %v840, 0.5
    %v843 = vmul.f32 %v841, 0.5
    %v844 = vmul.f32 %v822, %v842
    %v845 = vmul.f32 %v825, %v843
    %v846 = vpack.c.bf16 %v845, %v844
    %v847 = vld [vmem:[%s10] sm:$0xf]
    %v848 = vld [vmem:[%s10 + $0x4] sm:$0xf]
    %v849 = vld [vmem:[%s10 + $0x8] sm:$0xf]
    %v850 = vld [vmem:[%s10 + $0xc] sm:$0xf]
    %v851 = vld [vmem:[%s10 + $0x10] sm:$0xf]
    %v852 = vld [vmem:[%s10 + $0x14] sm:$0xf]
    %v853 = vld [vmem:[%s10 + $0x18] sm:$0xf]
    %v854 = vld [vmem:[%s10 + $0x1c] sm:$0xf]
    %v855 = vld [vmem:[%s11] sm:$0x1]
    %v857 = vlaneseq
    %v858 = vshrl.u32 %v857, 7
    %v859 = vsub.s32 0, %v858
    %v860 = vrot.slane %v855, %v859
    %v870 = vunpack.c.l.b16 %v847
    %v871 = vunpack.c.l.b16 %v848
    %v872 = vunpack.c.l.b16 %v849
    %v873 = vunpack.c.l.b16 %v850
    %v874 = vunpack.c.l.b16 %v851
    %v875 = vunpack.c.l.b16 %v852
    %v876 = vunpack.c.l.b16 %v853
    %v877 = vunpack.c.l.b16 %v854
    %v878 = vpack.c.b16 %v871, %v870
    %v879 = vpack.c.b16 %v873, %v872
    %v880 = vpack.c.b16 %v875, %v874
    %v881 = vpack.c.b16 %v877, %v876
    %vm886 = vcmask 523264
    %v888 = vsel %vm886, %v846, 0
    %890 = vmatprep.subr.bf16.mxu0 0
    %891 = vmatpush1.bf16.msra.mxu0 0
    %892 = vmatprep.subr.bf16.mxu0 0
    %893 = vmatpush1.bf16.msra.mxu0 0
    %894 = vmatprep.subr.bf16.mxu0 0
    %895 = vmatpush1.bf16.msra.mxu0 0
    %896 = vmatprep.subr.bf16.mxu0 0
    %897 = vmatpush1.bf16.msra.mxu0 0
    %898 = vmatprep.subr.bf16.mxu0 0
    %899 = vmatpush1.bf16.msra.mxu0 %v881
    %900 = vmatprep.subr.bf16.mxu0 0
    %901 = vmatpush1.bf16.msra.mxu0 %v880
    %902 = vmatprep.subr.bf16.mxu0 0
    %903 = vmatpush1.bf16.msra.mxu0 %v879
    %904 = vmatprep.subr.bf16.mxu0 0
    %905 = vmatpush1.bf16.msra.mxu0 %v878
    %906 = vmatprep.subr.bf16.mxu0 0
    %907 = vmatpush2.bf16.msra.mxu0 0
    %908 = vmatprep.subr.bf16.mxu0 0
    %909 = vmatpush2.bf16.msra.mxu0 0
    %910 = vmatprep.subr.bf16.mxu0 0
    %911 = vmatpush2.bf16.msra.mxu0 0
    %912 = vmatprep.subr.bf16.mxu0 0
    %913 = vmatpush2.bf16.msra.mxu0 0
    %914 = vmatprep.subr.bf16.mxu0 0
    %915 = vmatpush2.bf16.msra.mxu0 0
    %916 = vmatprep.subr.bf16.mxu0 0
    %917 = vmatpush2.bf16.msra.mxu0 0
    %918 = vmatprep.subr.bf16.mxu0 0
    %919 = vmatpush2.bf16.msra.mxu0 0
    %920 = vmatprep.subr.bf16.mxu0 0
    %921 = vmatpush2.bf16.msra.mxu0 0
    %922 = vmatprep.mubr.bf16.mxu0 0
    %923 = vmatmul.mubr.bf16.gmra.mxu0 %v888
    %v924 = vpop.f32.mrf.mxu0
    %v925 = vadd.f32 %v860, %v924
    %v926 = vpop.f32.mrf.mxu0
    %v927 = vpop.f32.mrf.mxu0
    %v928 = vadd.f32 %v860, %v927
    %v929 = vpop.f32.mrf.mxu0
    %930 = vdwg.mxu0
    %v931 = vadd.f32 %v925, %v758
    %v932 = vadd.f32 %v928, %v759
    %v933 = vld [vmem:[%s12] sm:$0x1]
    %v934 = vld [vmem:[%s13] sm:$0x1]
    %v935 = vsel %vm75, %v931, 0.0
    %936 = vadd.xlane.f32.xlu0 %v935
    %v937 = vpop.xlane.xlu0 %936
    %v938 = vsel %vm75, %v932, 0.0
    %939 = vadd.xlane.f32.xlu0 %v938
    %v940 = vpop.xlane.xlu0 %939
    %v941 = vmul.f32 %v937, %v723
    %v942 = vmul.f32 %v940, %v723
    %v943 = vsub.f32 %v931, %v941
    %v944 = vsub.f32 %v932, %v942
    %v945 = vmul.f32 %v943, %v943
    %v946 = vmul.f32 %v944, %v944
    %v947 = vsel %vm75, %v945, 0.0
    %948 = vadd.xlane.f32.xlu0 %v947
    %v949 = vpop.xlane.xlu0 %948
    %v950 = vsel %vm75, %v946, 0.0
    %951 = vadd.xlane.f32.xlu0 %v950
    %v952 = vpop.xlane.xlu0 %951
    %v953 = vmul.f32 %v949, %v723
    %v954 = vmul.f32 %v952, %v723
    %v955 = vadd.f32 %v953, 1e-05
    %v956 = vadd.f32 %v954, 1e-05
    %v957 = vrsqrt.pop %v955
    %v958 = vrsqrt.pop %v956
    %v959 = vmul.f32 %v943, %v957
    %v960 = vmul.f32 %v944, %v958
    %v962 = vlaneseq
    %v963 = vshrl.u32 %v962, 7
    %v964 = vsub.s32 0, %v963
    %v965 = vrot.slane %v933, %v964
    %v967 = vmul.f32 %v959, %v965
    %v968 = vmul.f32 %v960, %v965
    %v970 = vlaneseq
    %v971 = vshrl.u32 %v970, 7
    %v972 = vsub.s32 0, %v971
    %v973 = vrot.slane %v934, %v972
    %v975 = vadd.f32 %v967, %v973
    %v976 = vadd.f32 %v968, %v973
    %977 = vst.msk [vmem:[#allocation2] sm:$0xff] %vm75, %v975
    %978 = vst.msk [vmem:[#allocation2 + $0x8] sm:$0xff] %vm75, %v976
    // Predicated region
    $region58: #{roberta_forward.5} parent=1 // pred_check
      _
    $region59: #{roberta_forward.5} parent=1 // pred_check_branch
      %980 = sbr.rel (0) target = $region61
    $region60: #{roberta_forward.5} parent=1 // pred_region
      %s982 = ssub.s32 256, 256
      %983 = vsyncadd [#allocation3], %s982
      %s984 = sshll.u32 [#allocation2], 4
      %s985 = int_to_ptr.vmem [resolvable:$true] %s984
      %990 = dma.vmem_to_hbm [thread:$0]  %s985, 256, %s14, [#allocation3], 128, 128, 8
    $region61: #{roberta_forward.5} parent=1 // pred_fallthru
      _
    // Predicated region
    $region62: #{roberta_forward.5} parent=1 // pred_check
      _
    $region63: #{roberta_forward.5} parent=1 // pred_check_branch
      %992 = sbr.rel (0) target = $region65
    $region64: #{roberta_forward.5} parent=1 // pred_region
      %993 = dma.done [#allocation3], 256
    $region65: #{roberta_forward.5} parent=1 // pred_fallthru
      _
    %994 = vsyncpa [#allocation3], 1

</llo_original>
